<compile_context>
chip_gen: v7x
topology: tpu7x:2x2x1
jax: 0.10.0
libtpu: 0.0.40
codegen_flags: <defaults>
</compile_context>

<pallas_src>
import jax
import jax.numpy as jnp
from jax.experimental import pallas as pl
from jax.experimental.pallas import tpu as pltpu

SELU_ALPHA = 1.6732632423543772
SELU_SCALE = 1.0507009873554805
GN_EPS = 1e-5


def _selu(v):
    return SELU_SCALE * jnp.where(v > 0, v, SELU_ALPHA * (jnp.exp(v) - 1.0))


def _safe_inv(v):
    # exact 1/v for the loss normalizers (parity with the PyTorch reference);
    # returns 0 for degenerate (empty / edgeless / all-zero) cases.
    return jnp.where(v > 0, 1.0 / jnp.maximum(v, 1e-12), 0.0)


def _sum12(v):
    # (G, A, B) -> (G, 1, 1) via two single-axis reduces.
    return jnp.sum(jnp.sum(v, axis=2, keepdims=True), axis=1, keepdims=True)


def _net_kernel(counts_ref,                       # SMEM (B,) int32  (scalar prefetch)
                x_ref, adj_ref,
                gns_ref, gnb_ref,
                wg_ref, bg_ref, wp_ref, bp_ref,
                logp_ref, s_ref, loss_ref):
    f32 = jnp.float32
    bf16 = jnp.bfloat16

    x = x_ref[...]                    # (G, N, Fin) f32
    adj = adj_ref[...]                # (G, N, N)   bf16 -- stays bf16 (MXU-native)
    G, N, Fin = x.shape
    H = wg_ref.shape[1]
    C = wp_ref.shape[1]

    gn_scale = gns_ref[...].reshape(1, 1, Fin)    # folded GraphNorm scale  (w / std)
    gn_shift = gnb_ref[...].reshape(1, 1, Fin)    # folded GraphNorm shift  (b - scale*mean*a)
    Wg = wg_ref[...]                              # (Fin, H)
    bg = bg_ref[...].reshape(1, 1, H)
    Wp = wp_ref[...]                              # (H, C)
    bp = bp_ref[...]                              # (1, C)

    # ---- valid-node mask & counts rebuilt from scalar-prefetched node counts ----
    base = pl.program_id(0) * G
    node_iota = jax.lax.broadcasted_iota(jnp.int32, (G, N, 1), 1)
    graph_iota = jax.lax.broadcasted_iota(jnp.int32, (G, N, 1), 0)
    g_iota1 = jax.lax.broadcasted_iota(jnp.int32, (G, 1, 1), 0)
    mask = jnp.zeros((G, N, 1), f32)
    n_valid = jnp.zeros((G, 1, 1), f32)
    for g in range(G):                # static unroll; G is capped small in the wrapper
        c = counts_ref[base + g]
        mask = jnp.where((graph_iota == g) & (node_iota < c), 1.0, mask)
        n_valid = jnp.where(g_iota1 == g, c.astype(f32), n_valid)

    # ---- GraphNorm: batch-global stats (reference's norm(x) with batch=None),
    #      precomputed in the wrapper and applied here as a per-feature affine ----
    xn = x * gn_scale + gn_shift

    # ---- GCNConv: D^-1/2 (A+I) D^-1/2 (X W) + b   (A symmetric by construction) ----
    # node-wise matmul folded across the whole G*N slab (single MXU push).
    xw = jnp.dot(xn.reshape(G * N, Fin), Wg,
                 preferred_element_type=f32).reshape(G, N, H)     # (G,N,H)
    # row-sum of bf16 adj with f32 accumulation; single consumer -> streamed, no live f32 copy.
    deg_raw = jnp.sum(adj.astype(f32), axis=2, keepdims=True)     # (G,N,1)
    dis = jax.lax.rsqrt(deg_raw + 1.0)                            # +1 = self-loop degree
    y = dis * xw
    # (A + I) @ y == A @ y + y : no N x N identity / iota materialization.
    agg = jnp.einsum('gnm,gmh->gnh', adj, y.astype(bf16),
                     preferred_element_type=f32) + y
    h = _selu(dis * agg + bg) * mask                              # padded rows -> 0

    # ---- DMoNPooling: soft cluster assignment (matmul folded across G*N) ----
    logits = jnp.dot(h.reshape(G * N, H), Wp,
                     preferred_element_type=f32) + bp             # (G*N, C)
    lmax = jnp.max(logits, axis=-1, keepdims=True)
    e = jnp.exp(logits - lmax)
    sm = e * pl.reciprocal(jnp.sum(e, axis=-1, keepdims=True), approx=True)  # softmax only
    s = sm.reshape(G, N, C) * mask                                # (G,N,C)
    # TODO(synk): if writeback shows in a trace at large B, pack s/logp lane-dense (N*C==128).
    s_ref[...] = s

    # pooled node features: selu(s^T @ h) per graph
    sth = jnp.einsum('gnc,gnh->gch', s, h, preferred_element_type=f32)       # (G,C,H)
    out = _selu(sth)

    # ---- auxiliary losses ----
    degrees = deg_raw * mask                                      # (G,N,1)
    m2 = jnp.sum(degrees, axis=1, keepdims=True)                  # (G,1,1) == 2m
    inv_m2 = _safe_inv(m2)
    ca = jnp.sum(s * degrees, axis=1, keepdims=True)              # (G,1,C) == s^T d
    adj_s = jnp.einsum('gnm,gmc->gnc', adj, s.astype(bf16),
                       preferred_element_type=f32)                # (G,N,C)
    tr_out_adj = _sum12(s * adj_s)                                # trace(s^T A s)
    ca2 = jnp.sum(ca * ca, axis=2, keepdims=True)                 # (G,1,1)
    spectral = -(tr_out_adj - ca2 * inv_m2) * inv_m2

    ss = jnp.einsum('gnc,gnk->gck', s, s, preferred_element_type=f32)        # (G,C,C)
    ss_fro = jnp.sqrt(_sum12(ss * ss))
    inv_fro = _safe_inv(ss_fro)
    rc = jax.lax.broadcasted_iota(jnp.int32, (1, C, C), 1)
    cc = jax.lax.broadcasted_iota(jnp.int32, (1, C, C), 2)
    eye_c = jnp.where(rc == cc, 1.0, 0.0).astype(f32)             # tiny CxC eye only
    diff = ss * inv_fro - eye_c * (1.0 / (C ** 0.5))
    ortho = jnp.sqrt(_sum12(diff * diff))

    cluster_size = jnp.sum(s, axis=1, keepdims=True)              # (G,1,C)
    cs_norm = jnp.sqrt(jnp.sum(cluster_size * cluster_size, axis=2, keepdims=True))
    cluster = cs_norm * _safe_inv(n_valid) * (C ** 0.5) - 1.0

    # fully padded slots contribute 0 (instead of ortho=1 / cluster=-1)
    valid = jnp.where(n_valid > 0, 1.0, 0.0)
    spectral = spectral * valid
    ortho = ortho * valid
    cluster = cluster * valid

    # ---- log_softmax over feature dim of pooled x ----
    omax = jnp.max(out, axis=-1, keepdims=True)
    osh = out - omax
    lse = jnp.log(jnp.sum(jnp.exp(osh), axis=-1, keepdims=True))
    logp_ref[...] = osh - lse

    # per-graph loss components packed into a lane-dense (128-wide) row
    lane = jax.lax.broadcasted_iota(jnp.int32, (G, 1, 128), 2)
    loss_ref[...] = jnp.where(lane == 0, spectral,
                     jnp.where(lane == 1, ortho,
                      jnp.where(lane == 2, cluster, 0.0)))


# -------------------- wrapper: VMEM accounting, grid, pallas_call --------------------

def _round_up(v, m):
    return ((v + m - 1) // m) * m


def _per_graph_vmem_bytes(N, Fin, H, C):
    # PADDED footprint of every per-graph stream: last dim rounds to 128 lanes,
    # second-to-last to 8 sublanes (f32) / 16 (bf16).
    lane = lambda d: _round_up(d, 128)
    return (_round_up(N, 8) * lane(Fin) * 4        # x (f32)
            + _round_up(N, 16) * lane(N) * 2       # adj (bf16)
            + _round_up(N, 8) * lane(C) * 4        # s out (f32)
            + _round_up(C, 8) * lane(H) * 4        # logp out (f32)
            + 8 * 128 * 4)                         # per-graph loss row (f32)


def _vmem_limit_bytes():
    # Generation-aware: ~48 MiB on v7x (64 MiB physical per TC), up to 96 MiB on
    # v5e/v6e (128 MiB physical). Conservative 48 MiB fallback if the query fails.
    try:
        info = pltpu.get_tpu_info()
        cap = getattr(info, "vmem_capacity_bytes", None) or getattr(info, "vmem_bytes", None)
        if cap:
            return int(min(int(cap) * 3 // 4, 96 << 20))
    except Exception:
        pass
    return 48 << 20


def net_forward(x_dense, adj, mask, params, group_size=None):
    """Returns (log_softmax(pooled_x), spectral+ortho+cluster loss, s)."""
    B, N, Fin = x_dense.shape
    H = params["w_gcn"].shape[1]
    C = params["w_pool"].shape[1]
    assert N % 8 == 0, "N_max must be a multiple of 8 so (G,N,F)<->(G*N,F) reshapes are relabels"

    vmem_limit = _vmem_limit_bytes()
    if group_size is None:
        budget = vmem_limit - (2 << 20)                       # params + compiler-scratch headroom
        per_graph = 2 * _per_graph_vmem_bytes(N, Fin, H, C)   # double-buffered
        vmem_cap_graphs = max(1, budget // per_graph)
        # keep >= ~8 grid steps so each v7x TensorCore sees >= 3-4 steps (DMA overlap),
        # while amortizing the ~0.35us/step pipeline overhead at large B; cap G at 32
        # to bound the in-kernel mask-select unroll.
        group_size = max(1, min(vmem_cap_graphs, max(1, B // 8), 32))
        while B % group_size:
            group_size -= 1
    G = group_size
    assert B % G == 0, "batch must be divisible by the graph group size"
    num_groups = B // G

    # GraphNorm statistics: the reference calls norm(x) with batch=None -> one global
    # mean/var over every valid node in the batch. Cross-grid reduction, so it is done
    # here in plain JAX (tiny) and folded into a per-feature scale/shift for the kernel.
    f32 = jnp.float32
    msum = jnp.maximum(jnp.sum(mask), 1.0)
    gmean = jnp.sum(x_dense * mask, axis=(0, 1)) / msum                      # (Fin,)
    a = params["gn_mean_scale"].reshape(-1)
    w = params["gn_weight"].reshape(-1)
    b = params["gn_bias"].reshape(-1)
    centered = (x_dense - (gmean * a).reshape(1, 1, Fin)) * mask
    gvar = jnp.sum(centered * centered, axis=(0, 1)) / msum
    inv_std = jax.lax.rsqrt(gvar + GN_EPS)
    gn_scale = (w * inv_std).reshape(1, Fin).astype(f32)
    gn_shift = (b - w * inv_std * gmean * a).reshape(1, Fin).astype(f32)

    counts = jnp.sum(mask[..., 0], axis=1).astype(jnp.int32)                 # (B,)
    # adj holds small integer edge counts -> exact in bf16; halves the dominant HBM stream.
    adj_bf16 = adj.astype(jnp.bfloat16)

    gmap = lambda g, cnts: (g, 0, 0)
    pmap = lambda g, cnts: (0, 0)

    logp, s, losses = pl.pallas_call(
        _net_kernel,
        out_shape=(
            jax.ShapeDtypeStruct((B, C, H), jnp.float32),     # pooled log-probs
            jax.ShapeDtypeStruct((B, N, C), jnp.float32),     # soft assignments s
            jax.ShapeDtypeStruct((B, 1, 128), jnp.float32),   # per-graph losses (lane-dense)
        ),
        grid_spec=pltpu.PrefetchScalarGridSpec(
            num_scalar_prefetch=1,                            # counts -> SMEM
            grid=(num_groups,),
            in_specs=[
                pl.BlockSpec((G, N, Fin), gmap),
                pl.BlockSpec((G, N, N), gmap),                # TODO(synk): pl.Buffered(3) if a
                                                              # trace shows exposed adj DMA.
                pl.BlockSpec((1, Fin), pmap),
                pl.BlockSpec((1, Fin), pmap),
                pl.BlockSpec((Fin, H), pmap),
                pl.BlockSpec((1, H), pmap),
                pl.BlockSpec((H, C), pmap),
                pl.BlockSpec((1, C), pmap),
            ],
            out_specs=(
                pl.BlockSpec((G, C, H), gmap),
                pl.BlockSpec((G, N, C), gmap),
                pl.BlockSpec((G, 1, 128), gmap),
            ),
        ),
        compiler_params=pltpu.CompilerParams(
            dimension_semantics=("parallel",),
            vmem_limit_bytes=vmem_limit,
        ),
    )(counts, x_dense, adj_bf16, gn_scale, gn_shift,
      params["w_gcn"], params["b_gcn"], params["w_pool"], params["b_pool"])

    total_aux_loss = (losses[:, 0, 0].mean() + losses[:, 0, 1].mean()
                      + losses[:, 0, 2].mean())
    return logp, total_aux_loss, s


# -------------------- plain-JAX glue (dense batching / params) --------------------

def to_dense(x, edge_index, batch, num_graphs, n_max):
    # TODO(synk): to_dense_batch/to_dense_adj are data-dependent scatters; kept in plain JAX.
    n_total = x.shape[0]
    counts = jnp.zeros((num_graphs,), jnp.int32).at[batch].add(1)
    ptr = jnp.concatenate([jnp.zeros((1,), jnp.int32), jnp.cumsum(counts)[:-1]])
    pos = jnp.arange(n_total, dtype=jnp.int32) - ptr[batch]
    x_dense = jnp.zeros((num_graphs, n_max, x.shape[1]), jnp.float32).at[batch, pos].set(x)
    mask = jnp.zeros((num_graphs, n_max, 1), jnp.float32).at[batch, pos].set(1.0)
    src, dst = edge_index[0], edge_index[1]
    eb = batch[src]
    adj = jnp.zeros((num_graphs, n_max, n_max), jnp.float32).at[eb, pos[src], pos[dst]].add(1.0)
    return x_dense, adj, mask


def init_params(key, fin, hidden, k_clusters):
    k1, k2, k3 = jax.random.split(key, 3)
    return dict(
        gn_weight=jnp.ones((1, fin), jnp.float32),        # GraphNorm defaults
        gn_bias=jnp.zeros((1, fin), jnp.float32),
        gn_mean_scale=jnp.ones((1, fin), jnp.float32),
        w_gcn=(jax.random.normal(k1, (fin, hidden)) * (1.0 / (fin ** 0.5))).astype(jnp.float32),
        b_gcn=jnp.zeros((1, hidden), jnp.float32),
        w_pool=(jax.random.normal(k2, (hidden, k_clusters)) * (1.0 / (hidden ** 0.5))).astype(jnp.float32),
        b_pool=(jax.random.normal(k3, (1, k_clusters)) * 0.01).astype(jnp.float32),
    )


def ring_edges(n, offset):
    src = jnp.arange(n, dtype=jnp.int32) + offset
    dst = jnp.concatenate([jnp.arange(1, n, dtype=jnp.int32),
                           jnp.zeros((1,), jnp.int32)]) + offset
    return jnp.stack([jnp.concatenate([src, dst]), jnp.concatenate([dst, src])])


if __name__ == "__main__":
    key = jax.random.PRNGKey(0)
    in_channels, hidden_channels, out_channels = 4, 32, 8   # Net(in=4, out=8, hidden=32)
    num_graphs, n_max = 4, 16
    sizes = [16, 12, 14, 10]                                # graph sizes (some padded)

    kx, kp = jax.random.split(key)
    n_total = sum(sizes)
    x = jax.random.normal(kx, (n_total, in_channels), jnp.float32)
    batch = jnp.concatenate([jnp.full((n,), i, jnp.int32) for i, n in enumerate(sizes)])
    offsets = [0]
    for n in sizes[:-1]:
        offsets.append(offsets[-1] + n)
    edge_index = jnp.concatenate([ring_edges(n, off) for n, off in zip(sizes, offsets)], axis=1)

    params = init_params(kp, in_channels, hidden_channels, out_channels)
    x_dense, adj, mask = to_dense(x, edge_index, batch, num_graphs, n_max)

    logp, aux_loss, s = net_forward(x_dense, adj, mask, params)
    jax.block_until_ready((logp, aux_loss, s))

    assert logp.shape == (num_graphs, out_channels, hidden_channels)
    assert s.shape == (num_graphs, n_max, out_channels)
    assert bool(jnp.isfinite(logp).all())
    assert bool(jnp.isfinite(s).all())
    assert bool(jnp.isfinite(aux_loss))
    print("KERNEL_OK")
</pallas_src>

<mosaic_0001>
module attributes {stable_mosaic.version = 11 : i64} {
  func.func @_net_kernel(%arg0: i32, %arg1: memref<4xi32, #tpu.memory_space<smem>>, %arg2: memref<1x16x4xf32, #tpu.memory_space<vmem>>, %arg3: memref<1x16x16xbf16, #tpu.memory_space<vmem>>, %arg4: memref<1x4xf32, #tpu.memory_space<vmem>>, %arg5: memref<1x4xf32, #tpu.memory_space<vmem>>, %arg6: memref<4x32xf32, #tpu.memory_space<vmem>>, %arg7: memref<1x32xf32, #tpu.memory_space<vmem>>, %arg8: memref<32x8xf32, #tpu.memory_space<vmem>>, %arg9: memref<1x8xf32, #tpu.memory_space<vmem>>, %arg10: memref<1x8x32xf32, #tpu.memory_space<vmem>>, %arg11: memref<1x16x8xf32, #tpu.memory_space<vmem>>, %arg12: memref<1x1x128xf32, #tpu.memory_space<vmem>>) attributes {dimension_semantics = [#tpu.dimension_semantics<parallel>], iteration_bounds = array<i64: 4>, scalar_prefetch = 1 : i64, scratch_operands = 0 : i64, tpu.core_type = #tpu.core_type<tc>, window_params = [{transform_indices = @transform_0, window_bounds = array<i64: 1, 16, 4>}, {transform_indices = @transform_1, window_bounds = array<i64: 1, 16, 16>}, {pipeline_mode = #tpu.pipeline_mode<synchronous>, transform_indices = @transform_2, window_bounds = array<i64: 1, 4>}, {pipeline_mode = #tpu.pipeline_mode<synchronous>, transform_indices = @transform_3, window_bounds = array<i64: 1, 4>}, {pipeline_mode = #tpu.pipeline_mode<synchronous>, transform_indices = @transform_4, window_bounds = array<i64: 4, 32>}, {pipeline_mode = #tpu.pipeline_mode<synchronous>, transform_indices = @transform_5, window_bounds = array<i64: 1, 32>}, {pipeline_mode = #tpu.pipeline_mode<synchronous>, transform_indices = @transform_6, window_bounds = array<i64: 32, 8>}, {pipeline_mode = #tpu.pipeline_mode<synchronous>, transform_indices = @transform_7, window_bounds = array<i64: 1, 8>}, {transform_indices = @transform_8, window_bounds = array<i64: 1, 8, 32>}, {transform_indices = @transform_9, window_bounds = array<i64: 1, 16, 8>}, {transform_indices = @transform_10, window_bounds = array<i64: 1, 1, 128>}]} {
    %c0 = arith.constant 0 : index
    %c0_0 = arith.constant 0 : index
    %c0_1 = arith.constant 0 : index
    %0 = vector.load %arg2[%c0, %c0_0, %c0_1] : memref<1x16x4xf32, #tpu.memory_space<vmem>>, vector<1x16x4xf32>
    %c0_2 = arith.constant 0 : index
    %c0_3 = arith.constant 0 : index
    %c0_4 = arith.constant 0 : index
    %1 = vector.load %arg3[%c0_2, %c0_3, %c0_4] : memref<1x16x16xbf16, #tpu.memory_space<vmem>>, vector<1x16x16xbf16>
    %c0_5 = arith.constant 0 : index
    %c0_6 = arith.constant 0 : index
    %2 = vector.load %arg4[%c0_5, %c0_6] : memref<1x4xf32, #tpu.memory_space<vmem>>, vector<1x4xf32>
    %3 = vector.shape_cast %2 : vector<1x4xf32> to vector<1x1x4xf32>
    %c0_7 = arith.constant 0 : index
    %c0_8 = arith.constant 0 : index
    %4 = vector.load %arg5[%c0_7, %c0_8] : memref<1x4xf32, #tpu.memory_space<vmem>>, vector<1x4xf32>
    %5 = vector.shape_cast %4 : vector<1x4xf32> to vector<1x1x4xf32>
    %c0_9 = arith.constant 0 : index
    %c0_10 = arith.constant 0 : index
    %6 = vector.load %arg6[%c0_9, %c0_10] : memref<4x32xf32, #tpu.memory_space<vmem>>, vector<4x32xf32>
    %c0_11 = arith.constant 0 : index
    %c0_12 = arith.constant 0 : index
    %7 = vector.load %arg7[%c0_11, %c0_12] : memref<1x32xf32, #tpu.memory_space<vmem>>, vector<1x32xf32>
    %8 = vector.shape_cast %7 : vector<1x32xf32> to vector<1x1x32xf32>
    %c0_13 = arith.constant 0 : index
    %c0_14 = arith.constant 0 : index
    %9 = vector.load %arg8[%c0_13, %c0_14] : memref<32x8xf32, #tpu.memory_space<vmem>>, vector<32x8xf32>
    %c0_15 = arith.constant 0 : index
    %c0_16 = arith.constant 0 : index
    %10 = vector.load %arg9[%c0_15, %c0_16] : memref<1x8xf32, #tpu.memory_space<vmem>>, vector<1x8xf32>
    %c1_i32 = arith.constant 1 : i32
    %11 = arith.muli %arg0, %c1_i32 : i32
    %12 = tpu.iota {dimensions = array<i32: 1>} : vector<1x16x1xi32>
    %13 = tpu.iota {dimensions = array<i32: 0>} : vector<1x16x1xi32>
    %14 = tpu.iota {dimensions = array<i32: 0>} : vector<1x1x1xi32>
    %cst = arith.constant 0.000000e+00 : f32
    %15 = vector.broadcast %cst : f32 to vector<1x16x1xf32>
    %cst_17 = arith.constant 0.000000e+00 : f32
    %16 = vector.broadcast %cst_17 : f32 to vector<1x1x1xf32>
    %c0_i32 = arith.constant 0 : i32
    %17 = arith.addi %11, %c0_i32 : i32
    %18 = arith.index_cast %17 : i32 to index
    %19 = memref.load %arg1[%18] : memref<4xi32, #tpu.memory_space<smem>>
    %c0_i32_18 = arith.constant 0 : i32
    %20 = vector.broadcast %c0_i32_18 : i32 to vector<1x16x1xi32>
    %21 = arith.cmpi eq, %13, %20 : vector<1x16x1xi32>
    %22 = vector.broadcast %19 : i32 to vector<1x16x1xi32>
    %23 = arith.cmpi slt, %12, %22 : vector<1x16x1xi32>
    %24 = arith.andi %21, %23 : vector<1x16x1xi1>
    %cst_19 = arith.constant 1.000000e+00 : f32
    %25 = vector.broadcast %cst_19 : f32 to vector<1x16x1xf32>
    %26 = arith.select %24, %25, %15 : vector<1x16x1xi1>, vector<1x16x1xf32>
    %c0_i32_20 = arith.constant 0 : i32
    %27 = vector.broadcast %c0_i32_20 : i32 to vector<1x1x1xi32>
    %28 = arith.cmpi eq, %14, %27 : vector<1x1x1xi32>
    %29 = arith.sitofp %19 : i32 to f32
    %30 = vector.broadcast %29 : f32 to vector<1x1x1xf32>
    %31 = arith.select %28, %30, %16 : vector<1x1x1xi1>, vector<1x1x1xf32>
    %32 = vector.broadcast %3 : vector<1x1x4xf32> to vector<1x16x4xf32>
    %33 = arith.mulf %0, %32 : vector<1x16x4xf32>
    %34 = vector.broadcast %5 : vector<1x1x4xf32> to vector<1x16x4xf32>
    %35 = arith.addf %33, %34 : vector<1x16x4xf32>
    %36 = vector.shape_cast %35 : vector<1x16x4xf32> to vector<16x4xf32>
    %cst_21 = arith.constant dense<0.000000e+00> : vector<16x32xf32>
    %37 = tpu.matmul %36, %6, %cst_21 {dimension_numbers = #tpu.dot_dimension_numbers<[1], [0], [0], [1], [0, 0, 1, 1], [], []>} : vector<16x4xf32>, vector<4x32xf32>, vector<16x32xf32> -> vector<16x32xf32>
    %38 = vector.shape_cast %37 : vector<16x32xf32> to vector<1x16x32xf32>
    %39 = arith.extf %1 : vector<1x16x16xbf16> to vector<1x16x16xf32>
    %cst_22 = arith.constant dense<0.000000e+00> : vector<1x16xf32>
    %40 = vector.multi_reduction <add>, %39, %cst_22 [2] : vector<1x16x16xf32> to vector<1x16xf32>
    %41 = vector.shape_cast %40 : vector<1x16xf32> to vector<1x16x1xf32>
    %cst_23 = arith.constant 1.000000e+00 : f32
    %42 = vector.broadcast %cst_23 : f32 to vector<1x16x1xf32>
    %43 = arith.addf %41, %42 : vector<1x16x1xf32>
    %44 = math.rsqrt %43 : vector<1x16x1xf32>
    %45 = vector.broadcast %44 : vector<1x16x1xf32> to vector<1x16x32xf32>
    %46 = arith.mulf %45, %38 : vector<1x16x32xf32>
    %47 = arith.truncf %46 : vector<1x16x32xf32> to vector<1x16x32xbf16>
    "tpu.trace_start"() <{level = 10 : i32, message = "gnm,gmh->gnh"}> : () -> ()
    %cst_24 = arith.constant dense<0.000000e+00> : vector<1x16x32xf32>
    %48 = tpu.matmul %1, %47, %cst_24 {dimension_numbers = #tpu.dot_dimension_numbers<[2], [1], [1], [2], [0, 0, 0, 1, 1, 2], [0], [0]>} : vector<1x16x16xbf16>, vector<1x16x32xbf16>, vector<1x16x32xf32> -> vector<1x16x32xf32>
    "tpu.trace_stop"() : () -> ()
    %49 = arith.addf %48, %46 : vector<1x16x32xf32>
    %50 = vector.broadcast %44 : vector<1x16x1xf32> to vector<1x16x32xf32>
    %51 = arith.mulf %50, %49 : vector<1x16x32xf32>
    %52 = vector.broadcast %8 : vector<1x1x32xf32> to vector<1x16x32xf32>
    %53 = arith.addf %51, %52 : vector<1x16x32xf32>
    %cst_25 = arith.constant 0.000000e+00 : f32
    %54 = vector.broadcast %cst_25 : f32 to vector<1x16x32xf32>
    %55 = arith.cmpf ogt, %53, %54 : vector<1x16x32xf32>
    %56 = math.exp %53 : vector<1x16x32xf32>
    %cst_26 = arith.constant 1.000000e+00 : f32
    %57 = vector.broadcast %cst_26 : f32 to vector<1x16x32xf32>
    %58 = arith.subf %56, %57 : vector<1x16x32xf32>
    %cst_27 = arith.constant 1.67326319 : f32
    %59 = vector.broadcast %cst_27 : f32 to vector<1x16x32xf32>
    %60 = arith.mulf %59, %58 : vector<1x16x32xf32>
    %61 = arith.select %55, %53, %60 : vector<1x16x32xi1>, vector<1x16x32xf32>
    %cst_28 = arith.constant 1.05070102 : f32
    %62 = vector.broadcast %cst_28 : f32 to vector<1x16x32xf32>
    %63 = arith.mulf %62, %61 : vector<1x16x32xf32>
    %64 = vector.broadcast %26 : vector<1x16x1xf32> to vector<1x16x32xf32>
    %65 = arith.mulf %63, %64 : vector<1x16x32xf32>
    %66 = vector.shape_cast %65 : vector<1x16x32xf32> to vector<16x32xf32>
    %cst_29 = arith.constant dense<0.000000e+00> : vector<16x8xf32>
    %67 = tpu.matmul %66, %9, %cst_29 {dimension_numbers = #tpu.dot_dimension_numbers<[1], [0], [0], [1], [0, 0, 1, 1], [], []>} : vector<16x32xf32>, vector<32x8xf32>, vector<16x8xf32> -> vector<16x8xf32>
    %68 = vector.broadcast %10 : vector<1x8xf32> to vector<16x8xf32>
    %69 = arith.addf %67, %68 : vector<16x8xf32>
    %cst_30 = arith.constant dense<0xFF800000> : vector<16xf32>
    %70 = vector.multi_reduction <maximumf>, %69, %cst_30 [1] : vector<16x8xf32> to vector<16xf32>
    %71 = vector.shape_cast %70 : vector<16xf32> to vector<16x1xf32>
    %72 = vector.broadcast %71 : vector<16x1xf32> to vector<16x8xf32>
    %73 = arith.subf %69, %72 : vector<16x8xf32>
    %74 = math.exp %73 : vector<16x8xf32>
    %cst_31 = arith.constant dense<0.000000e+00> : vector<16xf32>
    %75 = vector.multi_reduction <add>, %74, %cst_31 [1] : vector<16x8xf32> to vector<16xf32>
    %76 = vector.shape_cast %75 : vector<16xf32> to vector<16x1xf32>
    %77 = tpu.reciprocal %76 {approx = true} : vector<16x1xf32> -> vector<16x1xf32>
    %78 = vector.broadcast %77 : vector<16x1xf32> to vector<16x8xf32>
    %79 = arith.mulf %74, %78 : vector<16x8xf32>
    %80 = vector.shape_cast %79 : vector<16x8xf32> to vector<1x16x8xf32>
    %81 = vector.broadcast %26 : vector<1x16x1xf32> to vector<1x16x8xf32>
    %82 = arith.mulf %80, %81 : vector<1x16x8xf32>
    %c0_32 = arith.constant 0 : index
    %c0_33 = arith.constant 0 : index
    %c0_34 = arith.constant 0 : index
    %83 = vector.load %arg11[%c0_32, %c0_33, %c0_34] : memref<1x16x8xf32, #tpu.memory_space<vmem>>, vector<1x16x8xf32>
    tpu.vector_store %arg11[%c0_32, %c0_33, %c0_34], %82 {strides = array<i32>} : memref<1x16x8xf32, #tpu.memory_space<vmem>>, vector<1x16x8xf32>,
    "tpu.trace_start"() <{level = 10 : i32, message = "gnc,gnh->gch"}> : () -> ()
    %cst_35 = arith.constant dense<0.000000e+00> : vector<1x8x32xf32>
    %84 = tpu.matmul %82, %65, %cst_35 {dimension_numbers = #tpu.dot_dimension_numbers<[1], [1], [2], [2], [0, 0, 0, 2, 1, 2], [0], [0]>} : vector<1x16x8xf32>, vector<1x16x32xf32>, vector<1x8x32xf32> -> vector<1x8x32xf32>
    %cst_36 = arith.constant 0.000000e+00 : f32
    "tpu.trace_stop"() : () -> ()
    %85 = vector.broadcast %cst_36 : f32 to vector<1x8x32xf32>
    %86 = arith.cmpf ogt, %84, %85 : vector<1x8x32xf32>
    %87 = math.exp %84 : vector<1x8x32xf32>
    %cst_37 = arith.constant 1.000000e+00 : f32
    %88 = vector.broadcast %cst_37 : f32 to vector<1x8x32xf32>
    %89 = arith.subf %87, %88 : vector<1x8x32xf32>
    %cst_38 = arith.constant 1.67326319 : f32
    %90 = vector.broadcast %cst_38 : f32 to vector<1x8x32xf32>
    %91 = arith.mulf %90, %89 : vector<1x8x32xf32>
    %92 = arith.select %86, %84, %91 : vector<1x8x32xi1>, vector<1x8x32xf32>
    %cst_39 = arith.constant 1.05070102 : f32
    %93 = vector.broadcast %cst_39 : f32 to vector<1x8x32xf32>
    %94 = arith.mulf %93, %92 : vector<1x8x32xf32>
    %95 = arith.mulf %41, %26 : vector<1x16x1xf32>
    %cst_40 = arith.constant dense<0.000000e+00> : vector<1x1xf32>
    %96 = vector.multi_reduction <add>, %95, %cst_40 [1] : vector<1x16x1xf32> to vector<1x1xf32>
    %97 = vector.shape_cast %96 : vector<1x1xf32> to vector<1x1x1xf32>
    %cst_41 = arith.constant 0.000000e+00 : f32
    %98 = vector.broadcast %cst_41 : f32 to vector<1x1x1xf32>
    %99 = arith.cmpf ogt, %97, %98 : vector<1x1x1xf32>
    %cst_42 = arith.constant 9.99999996E-13 : f32
    %100 = vector.broadcast %cst_42 : f32 to vector<1x1x1xf32>
    %101 = arith.maximumf %97, %100 : vector<1x1x1xf32>
    %cst_43 = arith.constant 1.000000e+00 : f32
    %102 = vector.broadcast %cst_43 : f32 to vector<1x1x1xf32>
    %103 = arith.divf %102, %101 : vector<1x1x1xf32>
    %cst_44 = arith.constant 0.000000e+00 : f32
    %104 = vector.broadcast %cst_44 : f32 to vector<1x1x1xf32>
    %105 = arith.select %99, %103, %104 : vector<1x1x1xi1>, vector<1x1x1xf32>
    %106 = vector.broadcast %95 : vector<1x16x1xf32> to vector<1x16x8xf32>
    %107 = arith.mulf %82, %106 : vector<1x16x8xf32>
    %cst_45 = arith.constant dense<0.000000e+00> : vector<1x8xf32>
    %108 = vector.multi_reduction <add>, %107, %cst_45 [1] : vector<1x16x8xf32> to vector<1x8xf32>
    %109 = vector.shape_cast %108 : vector<1x8xf32> to vector<1x1x8xf32>
    %110 = arith.truncf %82 : vector<1x16x8xf32> to vector<1x16x8xbf16>
    "tpu.trace_start"() <{level = 10 : i32, message = "gnm,gmc->gnc"}> : () -> ()
    %cst_46 = arith.constant dense<0.000000e+00> : vector<1x16x8xf32>
    %111 = tpu.matmul %1, %110, %cst_46 {dimension_numbers = #tpu.dot_dimension_numbers<[2], [1], [1], [2], [0, 0, 0, 1, 1, 2], [0], [0]>} : vector<1x16x16xbf16>, vector<1x16x8xbf16>, vector<1x16x8xf32> -> vector<1x16x8xf32>
    "tpu.trace_stop"() : () -> ()
    %112 = arith.mulf %82, %111 : vector<1x16x8xf32>
    %cst_47 = arith.constant dense<0.000000e+00> : vector<1x16xf32>
    %113 = vector.multi_reduction <add>, %112, %cst_47 [2] : vector<1x16x8xf32> to vector<1x16xf32>
    %114 = vector.shape_cast %113 : vector<1x16xf32> to vector<1x16x1xf32>
    %cst_48 = arith.constant dense<0.000000e+00> : vector<1x1xf32>
    %115 = vector.multi_reduction <add>, %114, %cst_48 [1] : vector<1x16x1xf32> to vector<1x1xf32>
    %116 = vector.shape_cast %115 : vector<1x1xf32> to vector<1x1x1xf32>
    %117 = arith.mulf %109, %109 : vector<1x1x8xf32>
    %cst_49 = arith.constant dense<0.000000e+00> : vector<1x1xf32>
    %118 = vector.multi_reduction <add>, %117, %cst_49 [2] : vector<1x1x8xf32> to vector<1x1xf32>
    %119 = vector.shape_cast %118 : vector<1x1xf32> to vector<1x1x1xf32>
    %120 = arith.mulf %119, %105 : vector<1x1x1xf32>
    %121 = arith.subf %116, %120 : vector<1x1x1xf32>
    %cst_50 = arith.constant 0.000000e+00 : f32
    %122 = vector.broadcast %cst_50 : f32 to vector<1x1x1xf32>
    %123 = arith.subf %122, %121 : vector<1x1x1xf32>
    %124 = arith.mulf %123, %105 : vector<1x1x1xf32>
    "tpu.trace_start"() <{level = 10 : i32, message = "gnc,gnk->gck"}> : () -> ()
    %cst_51 = arith.constant dense<0.000000e+00> : vector<1x8x8xf32>
    %125 = tpu.matmul %82, %82, %cst_51 {dimension_numbers = #tpu.dot_dimension_numbers<[1], [1], [2], [2], [0, 0, 0, 2, 1, 2], [0], [0]>} : vector<1x16x8xf32>, vector<1x16x8xf32>, vector<1x8x8xf32> -> vector<1x8x8xf32>
    "tpu.trace_stop"() : () -> ()
    %126 = arith.mulf %125, %125 : vector<1x8x8xf32>
    %cst_52 = arith.constant dense<0.000000e+00> : vector<1x8xf32>
    %127 = vector.multi_reduction <add>, %126, %cst_52 [2] : vector<1x8x8xf32> to vector<1x8xf32>
    %128 = vector.shape_cast %127 : vector<1x8xf32> to vector<1x8x1xf32>
    %cst_53 = arith.constant dense<0.000000e+00> : vector<1x1xf32>
    %129 = vector.multi_reduction <add>, %128, %cst_53 [1] : vector<1x8x1xf32> to vector<1x1xf32>
    %130 = vector.shape_cast %129 : vector<1x1xf32> to vector<1x1x1xf32>
    %131 = math.sqrt %130 : vector<1x1x1xf32>
    %cst_54 = arith.constant 0.000000e+00 : f32
    %132 = vector.broadcast %cst_54 : f32 to vector<1x1x1xf32>
    %133 = arith.cmpf ogt, %131, %132 : vector<1x1x1xf32>
    %cst_55 = arith.constant 9.99999996E-13 : f32
    %134 = vector.broadcast %cst_55 : f32 to vector<1x1x1xf32>
    %135 = arith.maximumf %131, %134 : vector<1x1x1xf32>
    %cst_56 = arith.constant 1.000000e+00 : f32
    %136 = vector.broadcast %cst_56 : f32 to vector<1x1x1xf32>
    %137 = arith.divf %136, %135 : vector<1x1x1xf32>
    %cst_57 = arith.constant 0.000000e+00 : f32
    %138 = vector.broadcast %cst_57 : f32 to vector<1x1x1xf32>
    %139 = arith.select %133, %137, %138 : vector<1x1x1xi1>, vector<1x1x1xf32>
    %140 = tpu.iota {dimensions = array<i32: 1>} : vector<1x8x8xi32>
    %141 = tpu.iota {dimensions = array<i32: 2>} : vector<1x8x8xi32>
    %142 = arith.cmpi eq, %140, %141 : vector<1x8x8xi32>
    %cst_58 = arith.constant 1.000000e+00 : f32
    %cst_59 = arith.constant 0.000000e+00 : f32
    %143 = vector.broadcast %cst_58 : f32 to vector<1x8x8xf32>
    %144 = vector.broadcast %cst_59 : f32 to vector<1x8x8xf32>
    %145 = arith.select %142, %143, %144 : vector<1x8x8xi1>, vector<1x8x8xf32>
    %146 = vector.broadcast %139 : vector<1x1x1xf32> to vector<1x8x8xf32>
    %147 = arith.mulf %125, %146 : vector<1x8x8xf32>
    %cst_60 = arith.constant 0.353553385 : f32
    %148 = vector.broadcast %cst_60 : f32 to vector<1x8x8xf32>
    %149 = arith.mulf %145, %148 : vector<1x8x8xf32>
    %150 = arith.subf %147, %149 : vector<1x8x8xf32>
    %151 = arith.mulf %150, %150 : vector<1x8x8xf32>
    %cst_61 = arith.constant dense<0.000000e+00> : vector<1x8xf32>
    %152 = vector.multi_reduction <add>, %151, %cst_61 [2] : vector<1x8x8xf32> to vector<1x8xf32>
    %153 = vector.shape_cast %152 : vector<1x8xf32> to vector<1x8x1xf32>
    %cst_62 = arith.constant dense<0.000000e+00> : vector<1x1xf32>
    %154 = vector.multi_reduction <add>, %153, %cst_62 [1] : vector<1x8x1xf32> to vector<1x1xf32>
    %155 = vector.shape_cast %154 : vector<1x1xf32> to vector<1x1x1xf32>
    %156 = math.sqrt %155 : vector<1x1x1xf32>
    %cst_63 = arith.constant dense<0.000000e+00> : vector<1x8xf32>
    %157 = vector.multi_reduction <add>, %82, %cst_63 [1] : vector<1x16x8xf32> to vector<1x8xf32>
    %158 = vector.shape_cast %157 : vector<1x8xf32> to vector<1x1x8xf32>
    %159 = arith.mulf %158, %158 : vector<1x1x8xf32>
    %cst_64 = arith.constant dense<0.000000e+00> : vector<1x1xf32>
    %160 = vector.multi_reduction <add>, %159, %cst_64 [2] : vector<1x1x8xf32> to vector<1x1xf32>
    %161 = vector.shape_cast %160 : vector<1x1xf32> to vector<1x1x1xf32>
    %162 = math.sqrt %161 : vector<1x1x1xf32>
    %cst_65 = arith.constant 0.000000e+00 : f32
    %163 = vector.broadcast %cst_65 : f32 to vector<1x1x1xf32>
    %164 = arith.cmpf ogt, %31, %163 : vector<1x1x1xf32>
    %cst_66 = arith.constant 9.99999996E-13 : f32
    %165 = vector.broadcast %cst_66 : f32 to vector<1x1x1xf32>
    %166 = arith.maximumf %31, %165 : vector<1x1x1xf32>
    %cst_67 = arith.constant 1.000000e+00 : f32
    %167 = vector.broadcast %cst_67 : f32 to vector<1x1x1xf32>
    %168 = arith.divf %167, %166 : vector<1x1x1xf32>
    %cst_68 = arith.constant 0.000000e+00 : f32
    %169 = vector.broadcast %cst_68 : f32 to vector<1x1x1xf32>
    %170 = arith.select %164, %168, %169 : vector<1x1x1xi1>, vector<1x1x1xf32>
    %171 = arith.mulf %162, %170 : vector<1x1x1xf32>
    %cst_69 = arith.constant 2.82842708 : f32
    %172 = vector.broadcast %cst_69 : f32 to vector<1x1x1xf32>
    %173 = arith.mulf %171, %172 : vector<1x1x1xf32>
    %cst_70 = arith.constant 1.000000e+00 : f32
    %174 = vector.broadcast %cst_70 : f32 to vector<1x1x1xf32>
    %175 = arith.subf %173, %174 : vector<1x1x1xf32>
    %cst_71 = arith.constant 0.000000e+00 : f32
    %176 = vector.broadcast %cst_71 : f32 to vector<1x1x1xf32>
    %177 = arith.cmpf ogt, %31, %176 : vector<1x1x1xf32>
    %cst_72 = arith.constant 1.000000e+00 : f32
    %cst_73 = arith.constant 0.000000e+00 : f32
    %178 = vector.broadcast %cst_72 : f32 to vector<1x1x1xf32>
    %179 = vector.broadcast %cst_73 : f32 to vector<1x1x1xf32>
    %180 = arith.select %177, %178, %179 : vector<1x1x1xi1>, vector<1x1x1xf32>
    %181 = arith.mulf %124, %180 : vector<1x1x1xf32>
    %182 = arith.mulf %156, %180 : vector<1x1x1xf32>
    %183 = arith.mulf %175, %180 : vector<1x1x1xf32>
    %cst_74 = arith.constant dense<0xFF800000> : vector<1x8xf32>
    %184 = vector.multi_reduction <maximumf>, %94, %cst_74 [2] : vector<1x8x32xf32> to vector<1x8xf32>
    %185 = vector.shape_cast %184 : vector<1x8xf32> to vector<1x8x1xf32>
    %186 = vector.broadcast %185 : vector<1x8x1xf32> to vector<1x8x32xf32>
    %187 = arith.subf %94, %186 : vector<1x8x32xf32>
    %188 = math.exp %187 : vector<1x8x32xf32>
    %cst_75 = arith.constant dense<0.000000e+00> : vector<1x8xf32>
    %189 = vector.multi_reduction <add>, %188, %cst_75 [2] : vector<1x8x32xf32> to vector<1x8xf32>
    %190 = vector.shape_cast %189 : vector<1x8xf32> to vector<1x8x1xf32>
    %191 = math.log %190 : vector<1x8x1xf32>
    %192 = vector.broadcast %191 : vector<1x8x1xf32> to vector<1x8x32xf32>
    %193 = arith.subf %187, %192 : vector<1x8x32xf32>
    %c0_76 = arith.constant 0 : index
    %c0_77 = arith.constant 0 : index
    %c0_78 = arith.constant 0 : index
    %194 = vector.load %arg10[%c0_76, %c0_77, %c0_78] : memref<1x8x32xf32, #tpu.memory_space<vmem>>, vector<1x8x32xf32>
    tpu.vector_store %arg10[%c0_76, %c0_77, %c0_78], %193 {strides = array<i32>} : memref<1x8x32xf32, #tpu.memory_space<vmem>>, vector<1x8x32xf32>,
    %195 = tpu.iota {dimensions = array<i32: 2>} : vector<1x1x128xi32>
    %c0_i32_79 = arith.constant 0 : i32
    %196 = vector.broadcast %c0_i32_79 : i32 to vector<1x1x128xi32>
    %197 = arith.cmpi eq, %195, %196 : vector<1x1x128xi32>
    %c1_i32_80 = arith.constant 1 : i32
    %198 = vector.broadcast %c1_i32_80 : i32 to vector<1x1x128xi32>
    %199 = arith.cmpi eq, %195, %198 : vector<1x1x128xi32>
    %c2_i32 = arith.constant 2 : i32
    %200 = vector.broadcast %c2_i32 : i32 to vector<1x1x128xi32>
    %201 = arith.cmpi eq, %195, %200 : vector<1x1x128xi32>
    %cst_81 = arith.constant 0.000000e+00 : f32
    %202 = vector.shape_cast %183 : vector<1x1x1xf32> to vector<1x1x1xf32>
    %203 = vector.broadcast %202 : vector<1x1x1xf32> to vector<1x1x128xf32>
    %204 = vector.broadcast %cst_81 : f32 to vector<1x1x128xf32>
    %205 = arith.select %201, %203, %204 : vector<1x1x128xi1>, vector<1x1x128xf32>
    %206 = vector.shape_cast %182 : vector<1x1x1xf32> to vector<1x1x1xf32>
    %207 = vector.broadcast %206 : vector<1x1x1xf32> to vector<1x1x128xf32>
    %208 = arith.select %199, %207, %205 : vector<1x1x128xi1>, vector<1x1x128xf32>
    %209 = vector.shape_cast %181 : vector<1x1x1xf32> to vector<1x1x1xf32>
    %210 = vector.broadcast %209 : vector<1x1x1xf32> to vector<1x1x128xf32>
    %211 = arith.select %197, %210, %208 : vector<1x1x128xi1>, vector<1x1x128xf32>
    %c0_82 = arith.constant 0 : index
    %c0_83 = arith.constant 0 : index
    %c0_84 = arith.constant 0 : index
    %212 = vector.load %arg12[%c0_82, %c0_83, %c0_84] : memref<1x1x128xf32, #tpu.memory_space<vmem>>, vector<1x1x128xf32>
    tpu.vector_store %arg12[%c0_82, %c0_83, %c0_84], %211 {strides = array<i32>} : memref<1x1x128xf32, #tpu.memory_space<vmem>>, vector<1x1x128xf32>,
    return
  }
  func.func @transform_0(%arg0: i32, %arg1: memref<4xi32, #tpu.memory_space<smem>>) -> (i32, i32, i32) {
    %c0_i32 = arith.constant 0 : i32
    %c0_i32_0 = arith.constant 0 : i32
    %c0_i32_1 = arith.constant 0 : i32
    return %arg0, %c0_i32, %c0_i32_0 : i32, i32, i32
  }
  func.func @transform_1(%arg0: i32, %arg1: memref<4xi32, #tpu.memory_space<smem>>) -> (i32, i32, i32) {
    %c0_i32 = arith.constant 0 : i32
    %c0_i32_0 = arith.constant 0 : i32
    %c0_i32_1 = arith.constant 0 : i32
    return %arg0, %c0_i32, %c0_i32_0 : i32, i32, i32
  }
  func.func @transform_2(%arg0: i32, %arg1: memref<4xi32, #tpu.memory_space<smem>>) -> (i32, i32) {
    %c0_i32 = arith.constant 0 : i32
    %c0_i32_0 = arith.constant 0 : i32
    %c0_i32_1 = arith.constant 0 : i32
    return %c0_i32, %c0_i32_0 : i32, i32
  }
  func.func @transform_3(%arg0: i32, %arg1: memref<4xi32, #tpu.memory_space<smem>>) -> (i32, i32) {
    %c0_i32 = arith.constant 0 : i32
    %c0_i32_0 = arith.constant 0 : i32
    %c0_i32_1 = arith.constant 0 : i32
    return %c0_i32, %c0_i32_0 : i32, i32
  }
  func.func @transform_4(%arg0: i32, %arg1: memref<4xi32, #tpu.memory_space<smem>>) -> (i32, i32) {
    %c0_i32 = arith.constant 0 : i32
    %c0_i32_0 = arith.constant 0 : i32
    %c0_i32_1 = arith.constant 0 : i32
    return %c0_i32, %c0_i32_0 : i32, i32
  }
  func.func @transform_5(%arg0: i32, %arg1: memref<4xi32, #tpu.memory_space<smem>>) -> (i32, i32) {
    %c0_i32 = arith.constant 0 : i32
    %c0_i32_0 = arith.constant 0 : i32
    %c0_i32_1 = arith.constant 0 : i32
    return %c0_i32, %c0_i32_0 : i32, i32
  }
  func.func @transform_6(%arg0: i32, %arg1: memref<4xi32, #tpu.memory_space<smem>>) -> (i32, i32) {
    %c0_i32 = arith.constant 0 : i32
    %c0_i32_0 = arith.constant 0 : i32
    %c0_i32_1 = arith.constant 0 : i32
    return %c0_i32, %c0_i32_0 : i32, i32
  }
  func.func @transform_7(%arg0: i32, %arg1: memref<4xi32, #tpu.memory_space<smem>>) -> (i32, i32) {
    %c0_i32 = arith.constant 0 : i32
    %c0_i32_0 = arith.constant 0 : i32
    %c0_i32_1 = arith.constant 0 : i32
    return %c0_i32, %c0_i32_0 : i32, i32
  }
  func.func @transform_8(%arg0: i32, %arg1: memref<4xi32, #tpu.memory_space<smem>>) -> (i32, i32, i32) {
    %c0_i32 = arith.constant 0 : i32
    %c0_i32_0 = arith.constant 0 : i32
    %c0_i32_1 = arith.constant 0 : i32
    return %arg0, %c0_i32, %c0_i32_0 : i32, i32, i32
  }
  func.func @transform_9(%arg0: i32, %arg1: memref<4xi32, #tpu.memory_space<smem>>) -> (i32, i32, i32) {
    %c0_i32 = arith.constant 0 : i32
    %c0_i32_0 = arith.constant 0 : i32
    %c0_i32_1 = arith.constant 0 : i32
    return %arg0, %c0_i32, %c0_i32_0 : i32, i32, i32
  }
  func.func @transform_10(%arg0: i32, %arg1: memref<4xi32, #tpu.memory_space<smem>>) -> (i32, i32, i32) {
    %c0_i32 = arith.constant 0 : i32
    %c0_i32_0 = arith.constant 0 : i32
    %c0_i32_1 = arith.constant 0 : i32
    return %arg0, %c0_i32, %c0_i32_0 : i32, i32, i32
  }
}

</mosaic_0001>

<llo_original>
// kernel: tpu_custom_call.1
$region0: #{tpu_custom_call.1}
  #allocation0 [shape = 'u32[]', space=smem, size = 0x4, offset = 0x4, fixed_abs, tag = 'smem constant byte address 0x4 - core index']
  #allocation1 [shape = 'u32[144,128]{1,0:T(1,128)}', space=vmem, size = 0x12000, scoped, tag = 'internal scratch']
  #allocation2 [shape = 's32[1]{0}', space=sflag, size = 0x4, scoped, tag = 'scoped memory for tpu_custom_call.1']
  #allocation3 [shape = 'u8[512]{0}', space=smem, size = 0x200, scoped, tag = 'prefetched SMEM operand 0']
  %s0 = inlined_call_operand.vmem [shape: s32[4], index: 0, kind: input, shape index: {}]
  %s1 = inlined_call_operand.vmem [shape: f32[4,16,4], index: 1, kind: input, shape index: {}]
  %s2 = inlined_call_operand.vmem [shape: bf16[4,16,16], index: 2, kind: input, shape index: {}]
  %s3 = inlined_call_operand.vmem [shape: f32[1,4], index: 3, kind: input, shape index: {}]
  %s4 = inlined_call_operand.vmem [shape: f32[1,4], index: 4, kind: input, shape index: {}]
  %s5 = inlined_call_operand.vmem [shape: f32[4,32], index: 5, kind: input, shape index: {}]
  %s6 = inlined_call_operand.vmem [shape: f32[1,32], index: 6, kind: input, shape index: {}]
  %s7 = inlined_call_operand.vmem [shape: f32[32,8], index: 7, kind: input, shape index: {}]
  %s8 = inlined_call_operand.vmem [shape: f32[1,8], index: 8, kind: input, shape index: {}]
  %s9 = inlined_call_operand.hbm [shape: f32[4,8,32], index: 9, kind: output, shape index: {0}]
  %s10 = inlined_call_operand.vmem [shape: f32[4,16,8], index: 10, kind: output, shape index: {1}]
  %s11 = inlined_call_operand.hbm [shape: f32[4,1,128], index: 11, kind: output, shape index: {2}]
  %12 = xla_tuple %s9, %s10, %s11
  %s13 = sld [smem:[#allocation0]]
  $region81: #{tpu_custom_call.1} parent=0
    _
  %s15 = ssub.s32 1, %s13
  %s16 = scalar_select 0, %s15, %s13
  %s17 = sshll.u32 %s0, 4
  %s18 = int_to_ptr.vmem [resolvable:$true] %s17
  %20 = dma.vmem_to_smem %s18, 16, [#allocation3], [#allocation2]
  %21 = dma.done [#allocation2], 16
  %22 = sfence
  $region1: #{tpu_custom_call.1} parent=0
    #allocation4 [shape = 'u8[8192]{0}', space=vmem, size = 0x2000, scoped, tag = 'output window, operand 0']
    #allocation5 [shape = 's32[2]{0}', space=sflag, size = 0x8, scoped, tag = 'scoped memory for tpu_custom_call.1']
    #allocation6 [shape = 'u8[1024]{0}', space=vmem, size = 0x400, scoped, tag = 'output window, operand 2']
    #allocation7 [shape = 's32[2]{0}', space=sflag, size = 0x8, scoped, tag = 'scoped memory for tpu_custom_call.1']
    %23 = vsyncpa [#allocation5], 0
    %s24 = scalar_lea.sflag [#allocation5], 1
    %25 = vsyncpa %s24, 0
    %26 = vsyncpa [#allocation7], 0
    %s27 = scalar_lea.sflag [#allocation7], 1
    %28 = vsyncpa %s27, 0
    loop: start=0, step=1, limit=6
    $region2: #{tpu_custom_call.1} parent=1 // loop_pre_header
      _
    $region3: #{tpu_custom_call.1} parent=1 // loop_header
      %s30 = sphi 0, %s34
      %p31 = scmp.ge.s32.totalorder %s30, 6
      %s40 = sphi 0, %s42
      %s43 = sphi 0, %s40
      %s44 = sphi 0, %s43
      %s60 = sphi 0, %s44
      %s66 = sphi 0, %s68
      %s69 = sphi 0, %s66
      %s70 = sphi 0, %s69
      %s86 = sphi 0, %s70
      %s90 = sphi 0, %s90
      %s92 = sphi 0, %s90
      %s93 = sphi 0, %s92
      %s107 = sphi 0, %s93
      %s111 = sphi 0, %s111
      %s113 = sphi 0, %s111
      %s114 = sphi 0, %s113
      %s128 = sphi 0, %s114
      %s132 = sphi 0, %s132
      %s134 = sphi 0, %s132
      %s135 = sphi 0, %s134
      %s149 = sphi 0, %s135
      %s153 = sphi 0, %s153
      %s155 = sphi 0, %s153
      %s156 = sphi 0, %s155
      %s170 = sphi 0, %s156
      %s174 = sphi 0, %s174
      %s176 = sphi 0, %s174
      %s177 = sphi 0, %s176
      %s191 = sphi 0, %s177
      %s195 = sphi 0, %s195
      %s197 = sphi 0, %s195
      %s198 = sphi 0, %s197
      %s212 = sphi 0, %s198
      %s218 = sphi 0, %s220
      %s221 = sphi 0, %s218
      %s222 = sphi 0, %s221
      %s238 = sphi 0, %s222
      %s244 = sphi 0, %s246
      %s247 = sphi 0, %s244
      %s248 = sphi 0, %s247
      %s264 = sphi 0, %s248
      %s270 = sphi 0, %s272
      %s273 = sphi 0, %s270
      %s274 = sphi 0, %s273
      %s290 = sphi 0, %s274
    $region4: #{tpu_custom_call.1} parent=1 // loop_header_branch
      %33 = sbr.rel (%p31) target = $region8
    $region5: #{tpu_custom_call.1} parent=1 // loop_body
      %s35 = ssub.s32 %s30, 1
      %s36 = ssub.s32 %s30, 2
      %s37 = sadd.s32 %s30, 1
      %s38 = ssub.s32 %s30, %s37
      %p39 = scmp.eq.s32.totalorder %s38, 0
      %s41 = sadd.s32 %s40, 1
      %s42 = scalar_select %p39, %s40, %s41
      %p45 = pneg %p39
      %p46 = scmp.eq.s32.totalorder %s30, 3
      %p47 = por %p45, %p46
      %p48 = scmp.ne.s32.totalorder %s40, %s43
      %p49 = scmp.eq.s32.totalorder %s30, 0
      %p50 = por %p48, %p49
      %p51 = scmp.ne.s32.totalorder %s40, %s43
      %p52 = scmp.eq.s32.totalorder %s35, 3
      %p53 = por %p51, %p52
      %p54 = scmp.ne.s32.totalorder %s43, %s44
      %p55 = scmp.eq.s32.totalorder %s35, 0
      %p56 = por %p54, %p55
      %p57 = scmp.ne.s32.totalorder %s43, %s44
      %p58 = scmp.eq.s32.totalorder %s36, 3
      %p59 = por %p57, %p58
      %p61 = scmp.ne.s32.totalorder %s44, %s60
      %p62 = scmp.eq.s32.totalorder %s36, 0
      %p63 = por %p61, %p62
      %s64 = ssub.s32 %s30, %s37
      %p65 = scmp.eq.s32.totalorder %s64, 0
      %s67 = sadd.s32 %s66, 1
      %s68 = scalar_select %p65, %s66, %s67
      %p71 = pneg %p65
      %p72 = scmp.eq.s32.totalorder %s30, 3
      %p73 = por %p71, %p72
      %p74 = scmp.ne.s32.totalorder %s66, %s69
      %p75 = scmp.eq.s32.totalorder %s30, 0
      %p76 = por %p74, %p75
      %p77 = scmp.ne.s32.totalorder %s66, %s69
      %p78 = scmp.eq.s32.totalorder %s35, 3
      %p79 = por %p77, %p78
      %p80 = scmp.ne.s32.totalorder %s69, %s70
      %p81 = scmp.eq.s32.totalorder %s35, 0
      %p82 = por %p80, %p81
      %p83 = scmp.ne.s32.totalorder %s69, %s70
      %p84 = scmp.eq.s32.totalorder %s36, 3
      %p85 = por %p83, %p84
      %p87 = scmp.ne.s32.totalorder %s70, %s86
      %p88 = scmp.eq.s32.totalorder %s36, 0
      %p89 = por %p87, %p88
      %s91 = sadd.s32 %s90, 1
      %p94 = scmp.eq.s32.totalorder %s30, 3
      %p95 = scmp.ne.s32.totalorder %s90, %s92
      %p96 = scmp.eq.s32.totalorder %s30, 0
      %p97 = por %p95, %p96
      %p98 = scmp.ne.s32.totalorder %s90, %s92
      %p99 = scmp.eq.s32.totalorder %s35, 3
      %p100 = por %p98, %p99
      %p101 = scmp.ne.s32.totalorder %s92, %s93
      %p102 = scmp.eq.s32.totalorder %s35, 0
      %p103 = por %p101, %p102
      %p104 = scmp.ne.s32.totalorder %s92, %s93
      %p105 = scmp.eq.s32.totalorder %s36, 3
      %p106 = por %p104, %p105
      %p108 = scmp.ne.s32.totalorder %s93, %s107
      %p109 = scmp.eq.s32.totalorder %s36, 0
      %p110 = por %p108, %p109
      %s112 = sadd.s32 %s111, 1
      %p115 = scmp.eq.s32.totalorder %s30, 3
      %p116 = scmp.ne.s32.totalorder %s111, %s113
      %p117 = scmp.eq.s32.totalorder %s30, 0
      %p118 = por %p116, %p117
      %p119 = scmp.ne.s32.totalorder %s111, %s113
      %p120 = scmp.eq.s32.totalorder %s35, 3
      %p121 = por %p119, %p120
      %p122 = scmp.ne.s32.totalorder %s113, %s114
      %p123 = scmp.eq.s32.totalorder %s35, 0
      %p124 = por %p122, %p123
      %p125 = scmp.ne.s32.totalorder %s113, %s114
      %p126 = scmp.eq.s32.totalorder %s36, 3
      %p127 = por %p125, %p126
      %p129 = scmp.ne.s32.totalorder %s114, %s128
      %p130 = scmp.eq.s32.totalorder %s36, 0
      %p131 = por %p129, %p130
      %s133 = sadd.s32 %s132, 1
      %p136 = scmp.eq.s32.totalorder %s30, 3
      %p137 = scmp.ne.s32.totalorder %s132, %s134
      %p138 = scmp.eq.s32.totalorder %s30, 0
      %p139 = por %p137, %p138
      %p140 = scmp.ne.s32.totalorder %s132, %s134
      %p141 = scmp.eq.s32.totalorder %s35, 3
      %p142 = por %p140, %p141
      %p143 = scmp.ne.s32.totalorder %s134, %s135
      %p144 = scmp.eq.s32.totalorder %s35, 0
      %p145 = por %p143, %p144
      %p146 = scmp.ne.s32.totalorder %s134, %s135
      %p147 = scmp.eq.s32.totalorder %s36, 3
      %p148 = por %p146, %p147
      %p150 = scmp.ne.s32.totalorder %s135, %s149
      %p151 = scmp.eq.s32.totalorder %s36, 0
      %p152 = por %p150, %p151
      %s154 = sadd.s32 %s153, 1
      %p157 = scmp.eq.s32.totalorder %s30, 3
      %p158 = scmp.ne.s32.totalorder %s153, %s155
      %p159 = scmp.eq.s32.totalorder %s30, 0
      %p160 = por %p158, %p159
      %p161 = scmp.ne.s32.totalorder %s153, %s155
      %p162 = scmp.eq.s32.totalorder %s35, 3
      %p163 = por %p161, %p162
      %p164 = scmp.ne.s32.totalorder %s155, %s156
      %p165 = scmp.eq.s32.totalorder %s35, 0
      %p166 = por %p164, %p165
      %p167 = scmp.ne.s32.totalorder %s155, %s156
      %p168 = scmp.eq.s32.totalorder %s36, 3
      %p169 = por %p167, %p168
      %p171 = scmp.ne.s32.totalorder %s156, %s170
      %p172 = scmp.eq.s32.totalorder %s36, 0
      %p173 = por %p171, %p172
      %s175 = sadd.s32 %s174, 1
      %p178 = scmp.eq.s32.totalorder %s30, 3
      %p179 = scmp.ne.s32.totalorder %s174, %s176
      %p180 = scmp.eq.s32.totalorder %s30, 0
      %p181 = por %p179, %p180
      %p182 = scmp.ne.s32.totalorder %s174, %s176
      %p183 = scmp.eq.s32.totalorder %s35, 3
      %p184 = por %p182, %p183
      %p185 = scmp.ne.s32.totalorder %s176, %s177
      %p186 = scmp.eq.s32.totalorder %s35, 0
      %p187 = por %p185, %p186
      %p188 = scmp.ne.s32.totalorder %s176, %s177
      %p189 = scmp.eq.s32.totalorder %s36, 3
      %p190 = por %p188, %p189
      %p192 = scmp.ne.s32.totalorder %s177, %s191
      %p193 = scmp.eq.s32.totalorder %s36, 0
      %p194 = por %p192, %p193
      %s196 = sadd.s32 %s195, 1
      %p199 = scmp.eq.s32.totalorder %s30, 3
      %p200 = scmp.ne.s32.totalorder %s195, %s197
      %p201 = scmp.eq.s32.totalorder %s30, 0
      %p202 = por %p200, %p201
      %p203 = scmp.ne.s32.totalorder %s195, %s197
      %p204 = scmp.eq.s32.totalorder %s35, 3
      %p205 = por %p203, %p204
      %p206 = scmp.ne.s32.totalorder %s197, %s198
      %p207 = scmp.eq.s32.totalorder %s35, 0
      %p208 = por %p206, %p207
      %p209 = scmp.ne.s32.totalorder %s197, %s198
      %p210 = scmp.eq.s32.totalorder %s36, 3
      %p211 = por %p209, %p210
      %p213 = scmp.ne.s32.totalorder %s198, %s212
      %p214 = scmp.eq.s32.totalorder %s36, 0
      %p215 = por %p213, %p214
      %s216 = ssub.s32 %s30, %s37
      %p217 = scmp.eq.s32.totalorder %s216, 0
      %s219 = sadd.s32 %s218, 1
      %s220 = scalar_select %p217, %s218, %s219
      %p223 = pneg %p217
      %p224 = scmp.eq.s32.totalorder %s30, 3
      %p225 = por %p223, %p224
      %p226 = scmp.ne.s32.totalorder %s218, %s221
      %p227 = scmp.eq.s32.totalorder %s30, 0
      %p228 = por %p226, %p227
      %p229 = scmp.ne.s32.totalorder %s218, %s221
      %p230 = scmp.eq.s32.totalorder %s35, 3
      %p231 = por %p229, %p230
      %p232 = scmp.ne.s32.totalorder %s221, %s222
      %p233 = scmp.eq.s32.totalorder %s35, 0
      %p234 = por %p232, %p233
      %p235 = scmp.ne.s32.totalorder %s221, %s222
      %p236 = scmp.eq.s32.totalorder %s36, 3
      %p237 = por %p235, %p236
      %p239 = scmp.ne.s32.totalorder %s222, %s238
      %p240 = scmp.eq.s32.totalorder %s36, 0
      %p241 = por %p239, %p240
      %s242 = ssub.s32 %s30, %s37
      %p243 = scmp.eq.s32.totalorder %s242, 0
      %s245 = sadd.s32 %s244, 1
      %s246 = scalar_select %p243, %s244, %s245
      %p249 = pneg %p243
      %p250 = scmp.eq.s32.totalorder %s30, 3
      %p251 = por %p249, %p250
      %p252 = scmp.ne.s32.totalorder %s244, %s247
      %p253 = scmp.eq.s32.totalorder %s30, 0
      %p254 = por %p252, %p253
      %p255 = scmp.ne.s32.totalorder %s244, %s247
      %p256 = scmp.eq.s32.totalorder %s35, 3
      %p257 = por %p255, %p256
      %p258 = scmp.ne.s32.totalorder %s247, %s248
      %p259 = scmp.eq.s32.totalorder %s35, 0
      %p260 = por %p258, %p259
      %p261 = scmp.ne.s32.totalorder %s247, %s248
      %p262 = scmp.eq.s32.totalorder %s36, 3
      %p263 = por %p261, %p262
      %p265 = scmp.ne.s32.totalorder %s248, %s264
      %p266 = scmp.eq.s32.totalorder %s36, 0
      %p267 = por %p265, %p266
      %s268 = ssub.s32 %s30, %s37
      %p269 = scmp.eq.s32.totalorder %s268, 0
      %s271 = sadd.s32 %s270, 1
      %s272 = scalar_select %p269, %s270, %s271
      %p275 = pneg %p269
      %p276 = scmp.eq.s32.totalorder %s30, 3
      %p277 = por %p275, %p276
      %p278 = scmp.ne.s32.totalorder %s270, %s273
      %p279 = scmp.eq.s32.totalorder %s30, 0
      %p280 = por %p278, %p279
      %p281 = scmp.ne.s32.totalorder %s270, %s273
      %p282 = scmp.eq.s32.totalorder %s35, 3
      %p283 = por %p281, %p282
      %p284 = scmp.ne.s32.totalorder %s273, %s274
      %p285 = scmp.eq.s32.totalorder %s35, 0
      %p286 = por %p284, %p285
      %p287 = scmp.ne.s32.totalorder %s273, %s274
      %p288 = scmp.eq.s32.totalorder %s36, 3
      %p289 = por %p287, %p288
      %p291 = scmp.ne.s32.totalorder %s274, %s290
      %p292 = scmp.eq.s32.totalorder %s36, 0
      %p293 = por %p291, %p292
      %p294 = scmp.le.s32.totalorder 1, %s30
      %p295 = scmp.lt.s32.totalorder %s30, 5
      %p296 = pnand %p294, %p295
      %p297 = pneg %p296
      // Predicated region
      $region9: #{tpu_custom_call.1} parent=5 // pred_check
        _
      $region10: #{tpu_custom_call.1} parent=5 // pred_check_branch
        %299 = sbr.rel (%p296) target = $region12
      $region11: #{tpu_custom_call.1} parent=5 // pred_region
        %s300 = ssub.s32 %s30, 1
        // Predicated region
        $region13: #{tpu_custom_call.1} parent=11 // pred_check
          %p301 = pneg %p103
        $region14: #{tpu_custom_call.1} parent=11 // pred_check_branch
          %303 = sbr.rel (%p301) target = $region16
        $region15: #{tpu_custom_call.1} parent=11 // pred_region
          _
        $region16: #{tpu_custom_call.1} parent=11 // pred_fallthru
          _
        // Predicated region
        $region17: #{tpu_custom_call.1} parent=11 // pred_check
          %p304 = pneg %p124
        $region18: #{tpu_custom_call.1} parent=11 // pred_check_branch
          %306 = sbr.rel (%p304) target = $region20
        $region19: #{tpu_custom_call.1} parent=11 // pred_region
          _
        $region20: #{tpu_custom_call.1} parent=11 // pred_fallthru
          _
        // Predicated region
        $region21: #{tpu_custom_call.1} parent=11 // pred_check
          %p307 = pneg %p145
        $region22: #{tpu_custom_call.1} parent=11 // pred_check_branch
          %309 = sbr.rel (%p307) target = $region24
        $region23: #{tpu_custom_call.1} parent=11 // pred_region
          _
        $region24: #{tpu_custom_call.1} parent=11 // pred_fallthru
          _
        // Predicated region
        $region25: #{tpu_custom_call.1} parent=11 // pred_check
          %p310 = pneg %p166
        $region26: #{tpu_custom_call.1} parent=11 // pred_check_branch
          %312 = sbr.rel (%p310) target = $region28
        $region27: #{tpu_custom_call.1} parent=11 // pred_region
          _
        $region28: #{tpu_custom_call.1} parent=11 // pred_fallthru
          _
        // Predicated region
        $region29: #{tpu_custom_call.1} parent=11 // pred_check
          %p313 = pneg %p187
        $region30: #{tpu_custom_call.1} parent=11 // pred_check_branch
          %315 = sbr.rel (%p313) target = $region32
        $region31: #{tpu_custom_call.1} parent=11 // pred_region
          _
        $region32: #{tpu_custom_call.1} parent=11 // pred_fallthru
          _
        // Predicated region
        $region33: #{tpu_custom_call.1} parent=11 // pred_check
          %p316 = pneg %p208
        $region34: #{tpu_custom_call.1} parent=11 // pred_check_branch
          %318 = sbr.rel (%p316) target = $region36
        $region35: #{tpu_custom_call.1} parent=11 // pred_region
          _
        $region36: #{tpu_custom_call.1} parent=11 // pred_fallthru
          _
      $region12: #{tpu_custom_call.1} parent=5 // pred_fallthru
        _
      %p319 = scmp.lt.s32.totalorder %s30, 4
      // Predicated region
      $region37: #{tpu_custom_call.1} parent=5 // pred_check
        %p320 = pneg %p319
      $region38: #{tpu_custom_call.1} parent=5 // pred_check_branch
        %322 = sbr.rel (%p320) target = $region40
      $region39: #{tpu_custom_call.1} parent=5 // pred_region
        // Predicated region
        $region41: #{tpu_custom_call.1} parent=39 // pred_check
          %p323 = pneg %p50
        $region42: #{tpu_custom_call.1} parent=39 // pred_check_branch
          %325 = sbr.rel (%p323) target = $region44
        $region43: #{tpu_custom_call.1} parent=39 // pred_region
          %p326 = scmp.lt.s32.totalorder %s30, 3
          %s327 = scalar_select %p326, %s30, 3
          %s328 = smul.addr %s327, 2
          %s329 = smul.addr %s328, 8
          %s330 = scalar_lea.vmem %s1, %s329
        $region44: #{tpu_custom_call.1} parent=39 // pred_fallthru
          _
        // Predicated region
        $region45: #{tpu_custom_call.1} parent=39 // pred_check
          %p331 = pneg %p76
        $region46: #{tpu_custom_call.1} parent=39 // pred_check_branch
          %333 = sbr.rel (%p331) target = $region48
        $region47: #{tpu_custom_call.1} parent=39 // pred_region
          %p334 = scmp.lt.s32.totalorder %s30, 3
          %s335 = scalar_select %p334, %s30, 3
          %s336 = smul.addr %s335, 2
          %s337 = smul.addr %s336, 4
          %s338 = scalar_lea.vmem %s2, %s337
        $region48: #{tpu_custom_call.1} parent=39 // pred_fallthru
          _
      $region40: #{tpu_custom_call.1} parent=5 // pred_fallthru
        _
      %p339 = scmp.le.s32.totalorder 1, %s30
      %p340 = scmp.lt.s32.totalorder %s30, 5
      %p341 = pnand %p339, %p340
      %p342 = pneg %p341
      // Predicated region
      $region49: #{tpu_custom_call.1} parent=5 // pred_check
        _
      $region50: #{tpu_custom_call.1} parent=5 // pred_check_branch
        %344 = sbr.rel (%p341) target = $region52
      $region51: #{tpu_custom_call.1} parent=5 // pred_region
        %s345 = ssub.s32 %s30, 1
        %p346 = scmp.lt.s32.totalorder %s35, 3
        %s347 = scalar_select %p346, %s35, 3
        %s348 = smul.addr %s347, 2
        %s349 = smul.addr %s348, 8
        %s350 = scalar_lea.vmem %s1, %s349
        %p351 = pneg %p56
        %p352 = pneg %p53
        %p353 = scmp.lt.s32.totalorder %s35, 3
        %s354 = scalar_select %p353, %s35, 3
        %s355 = smul.addr %s354, 2
        %s356 = smul.addr %s355, 4
        %s357 = scalar_lea.vmem %s2, %s356
        %p358 = pneg %p82
        %p359 = pneg %p79
        %p360 = pneg %p103
        %p361 = pneg %p100
        %p362 = pneg %p124
        %p363 = pneg %p121
        %p364 = pneg %p145
        %p365 = pneg %p142
        %p366 = pneg %p166
        %p367 = pneg %p163
        %p368 = pneg %p187
        %p369 = pneg %p184
        %p370 = pneg %p208
        %p371 = pneg %p205
        %p372 = pneg %p234
        %p373 = pneg %p231
        %s374 = sand.u32 %s221, 1
        %s375 = scalar_lea.sflag [#allocation5], %s374
        %s376 = sand.u32 %s221, 1
        %s377 = smul.addr %s376, 8
        %s378 = scalar_lea.vmem [#allocation4], %s377
        %p379 = pneg %p260
        %p380 = pneg %p257
        %p381 = scmp.lt.s32.totalorder %s35, 3
        %s382 = scalar_select %p381, %s35, 3
        %s383 = smul.addr %s382, 2
        %s384 = smul.addr %s383, 8
        %s385 = scalar_lea.vmem %s10, %s384
        %p386 = pneg %p286
        %p387 = pneg %p283
        %s388 = sand.u32 %s273, 1
        %s389 = scalar_lea.sflag [#allocation7], %s388
        %s390 = sand.u32 %s273, 1
        %s391 = scalar_lea.vmem [#allocation6], %s390
        %p392 = scmp.lt.s32.totalorder %s35, 3
        %s393 = scalar_select %p392, %s35, 3
        %s394 = smul.addr %s393, 2
        %s395 = smul.addr %s394, 8
        %s396 = scalar_lea.vmem %s1, %s395
        %p397 = scmp.lt.s32.totalorder %s35, 3
        %s398 = scalar_select %p397, %s35, 3
        %s399 = smul.addr %s398, 2
        %s400 = smul.addr %s399, 4
        %s401 = scalar_lea.vmem %s2, %s400
        %p402 = scmp.lt.s32.totalorder %s35, 3
        %s403 = scalar_select %p402, %s35, 3
        %s404 = smul.addr %s403, 2
        %s405 = smul.addr %s404, 8
        %s406 = scalar_lea.vmem %s10, %s405
        %v408 = vld [vmem:[%s396] sm:$0xff]
        %v409 = vld [vmem:[%s396 + $0x8] sm:$0xff]
        %v410 = vld [vmem:[%s401] sm:$0xf]
        %v411 = vld [vmem:[%s401 + $0x4] sm:$0xf]
        %v412 = vld [vmem:[%s3] sm:$0x1]
        %v413 = vld [vmem:[%s4] sm:$0x1]
        %v414 = vld [vmem:[%s5] sm:$0xf]
        %v415 = vld [vmem:[%s6] sm:$0x1]
        %v416 = vld [vmem:[%s7] sm:$0xff]
        %v417 = vld [vmem:[%s7 + $0x8] sm:$0xff]
        %v418 = vld [vmem:[%s7 + $0x10] sm:$0xff]
        %v419 = vld [vmem:[%s7 + $0x18] sm:$0xff]
        %v420 = vld [vmem:[%s8] sm:$0x1]
        %v421 = vlaneseq
        %v422 = vshrl.u32 %v421, 7
        %v423 = vadd.s32 %v422, 8
        %s424 = sld [smem:[#allocation3 + %s35]]
        %v425 = vstv %s424
        %vm426 = vcmp.lt.s32.totalorder %v422, %v425
        %vm427 = vcmp.lt.s32.totalorder %v423, %v425
        %vm428 = vmand 1, %vm426
        %vm429 = vmand 1, %vm427
        %v430 = vsel %vm428, 1.0, 0.0
        %v431 = vsel %vm429, 1.0, 0.0
        %s432 = scvt.s32.f32 %s424
        %v433 = vstv %s432
        %v435 = vlaneseq
        %v436 = vshrl.u32 %v435, 7
        %v437 = vsub.s32 0, %v436
        %v438 = vrot.slane %v412, %v437
        %v440 = vmul.f32 %v408, %v438
        %v441 = vmul.f32 %v409, %v438
        %v443 = vlaneseq
        %v444 = vshrl.u32 %v443, 7
        %v445 = vsub.s32 0, %v444
        %v446 = vrot.slane %v413, %v445
        %v448 = vadd.f32 %v440, %v446
        %v449 = vadd.f32 %v441, %v446
        %vm450 = vcmask 31744
        %v452 = vsel %vm450, %v448, 0
        %v455 = vsel %vm450, %v449, 0
        %vm457 = vcmask 1043456
        %v459 = vsel %vm457, %v414, 0
        %461 = vmatprep.subr.mxu0 0.0
        %462 = vmatpush1.msra.mxu0 %v459
        %463 = vmatprep.subr.mxu0 0.0
        %464 = vmatpush1.msra.mxu0 0.0
        %465 = vmatprep.subr.mxu0 0.0
        %466 = vmatpush1.msra.mxu0 0.0
        %467 = vmatprep.subr.mxu0 0.0
        %468 = vmatpush1.msra.mxu0 0.0
        %469 = vmatprep.subr.mxu0 0.0
        %470 = vmatpush1.msra.mxu0 0.0
        %471 = vmatprep.subr.mxu0 0.0
        %472 = vmatpush1.msra.mxu0 0.0
        %473 = vmatprep.subr.mxu0 0.0
        %474 = vmatpush1.msra.mxu0 0.0
        %475 = vmatprep.subr.mxu0 0.0
        %476 = vmatpush1.msra.mxu0 0.0
        %477 = vmatprep.subr.mxu0 0.0
        %478 = vmatpush1.msra.mxu0 0.0
        %479 = vmatprep.subr.mxu0 0.0
        %480 = vmatpush1.msra.mxu0 0.0
        %481 = vmatprep.subr.mxu0 0.0
        %482 = vmatpush1.msra.mxu0 0.0
        %483 = vmatprep.subr.mxu0 0.0
        %484 = vmatpush1.msra.mxu0 0.0
        %485 = vmatprep.subr.mxu0 0.0
        %486 = vmatpush1.msra.mxu0 0.0
        %487 = vmatprep.subr.mxu0 0.0
        %488 = vmatpush1.msra.mxu0 0.0
        %489 = vmatprep.subr.mxu0 0.0
        %490 = vmatpush1.msra.mxu0 0.0
        %491 = vmatprep.subr.mxu0 0.0
        %492 = vmatpush1.msra.mxu0 0.0
        %493 = vmatprep.subr.mxu0 0.0
        %494 = vmatpush1.msra.mxu0 0.0
        %495 = vmatprep.subr.mxu0 0.0
        %496 = vmatpush1.msra.mxu0 0.0
        %497 = vmatprep.subr.mxu0 0.0
        %498 = vmatpush1.msra.mxu0 0.0
        %499 = vmatprep.subr.mxu0 0.0
        %500 = vmatpush1.msra.mxu0 0.0
        %501 = vmatprep.subr.mxu0 0.0
        %502 = vmatpush1.msra.mxu0 0.0
        %503 = vmatprep.subr.mxu0 0.0
        %504 = vmatpush1.msra.mxu0 0.0
        %505 = vmatprep.subr.mxu0 0.0
        %506 = vmatpush1.msra.mxu0 0.0
        %507 = vmatprep.subr.mxu0 0.0
        %508 = vmatpush1.msra.mxu0 0.0
        %509 = vmatprep.subr.mxu0 0.0
        %510 = vmatpush1.msra.mxu0 0.0
        %511 = vmatprep.subr.mxu0 0.0
        %512 = vmatpush1.msra.mxu0 0.0
        %513 = vmatprep.subr.mxu0 0.0
        %514 = vmatpush1.msra.mxu0 0.0
        %515 = vmatprep.subr.mxu0 0.0
        %516 = vmatpush1.msra.mxu0 0.0
        %517 = vmatprep.subr.mxu0 0.0
        %518 = vmatpush1.msra.mxu0 0.0
        %519 = vmatprep.subr.mxu0 0.0
        %520 = vmatpush1.msra.mxu0 0.0
        %521 = vmatprep.subr.mxu0 0.0
        %522 = vmatpush1.msra.mxu0 0.0
        %523 = vmatprep.subr.mxu0 0.0
        %524 = vmatpush1.msra.mxu0 0.0
        %525 = vmatprep.mubr.f32.mxu0 0.0
        %526 = vmatmul.mubr.f32.gmra.mrb[0].mxu0 %v452
        %v527 = vpop.f32.mrb[0].mxu0
        %v528 = vadd.f32 0.0, %v527
        %v529 = vpop.f32.mrb[0].mxu0
        %530 = vmatprep.mubr.f32.mxu0 0.0
        %531 = vmatmul.mubr.f32.gmra.mrb[0].mxu0 %v455
        %v532 = vpop.f32.mrb[0].mxu0
        %v533 = vadd.f32 0.0, %v532
        %v534 = vpop.f32.mrb[0].mxu0
        %535 = vdwg.mxu0
        %v536 = vunpack.c.l.bf16 %v410
        %v537 = vunpack.c.l.bf16 %v411
        %vm538 = vcmask 130048
        %v539 = vsel %vm538, %v536, 0.0
        %540 = vadd.xlane.f32.xlu0 %v539
        %v541 = vpop.xlane.xlu0 %540
        %v542 = vsel %vm538, %v537, 0.0
        %543 = vadd.xlane.f32.xlu0 %v542
        %v544 = vpop.xlane.xlu0 %543
        %v545 = vadd.f32 %v541, 1.0
        %v546 = vadd.f32 %v544, 1.0
        %v547 = vrsqrt.pop %v545
        %v548 = vrsqrt.pop %v546
        %v549 = vmul.f32 %v547, %v528
        %v550 = vmul.f32 %v548, %v533
        %v551 = vpack.c.bf16 %v550, %v549
        %v554 = vunpack.c.l.b16 %v410
        %v555 = vunpack.c.l.b16 %v411
        %v556 = vpack.c.b16 %v555, %v554
        %v558 = vsel %vm538, %v556, 0
        %560 = vmatprep.subr.bf16.mxu0 0
        %561 = vmatpush1.bf16.msra.mxu0 %v551
        %562 = vmatprep.subr.bf16.mxu0 0
        %563 = vmatpush1.bf16.msra.mxu0 0
        %564 = vmatprep.subr.bf16.mxu0 0
        %565 = vmatpush1.bf16.msra.mxu0 0
        %566 = vmatprep.subr.bf16.mxu0 0
        %567 = vmatpush1.bf16.msra.mxu0 0
        %568 = vmatprep.subr.bf16.mxu0 0
        %569 = vmatpush1.bf16.msra.mxu0 0
        %570 = vmatprep.subr.bf16.mxu0 0
        %571 = vmatpush1.bf16.msra.mxu0 0
        %572 = vmatprep.subr.bf16.mxu0 0
        %573 = vmatpush1.bf16.msra.mxu0 0
        %574 = vmatprep.subr.bf16.mxu0 0
        %575 = vmatpush1.bf16.msra.mxu0 0
        %576 = vmatprep.subr.bf16.mxu0 0
        %577 = vmatpush1.bf16.msra.mxu0 0
        %578 = vmatprep.subr.bf16.mxu0 0
        %579 = vmatpush1.bf16.msra.mxu0 0
        %580 = vmatprep.subr.bf16.mxu0 0
        %581 = vmatpush1.bf16.msra.mxu0 0
        %582 = vmatprep.subr.bf16.mxu0 0
        %583 = vmatpush1.bf16.msra.mxu0 0
        %584 = vmatprep.subr.bf16.mxu0 0
        %585 = vmatpush1.bf16.msra.mxu0 0
        %586 = vmatprep.subr.bf16.mxu0 0
        %587 = vmatpush1.bf16.msra.mxu0 0
        %588 = vmatprep.subr.bf16.mxu0 0
        %589 = vmatpush1.bf16.msra.mxu0 0
        %590 = vmatprep.subr.bf16.mxu0 0
        %591 = vmatpush1.bf16.msra.mxu0 0
        %592 = vmatprep.mubr.bf16.mxu0 0
        %593 = vmatmul.mubr.bf16.gmra.mrb[0].mxu0 %v558
        %v594 = vpop.f32.mrb[0].mxu0
        %v595 = vadd.f32 %v549, %v594
        %v596 = vpop.f32.mrb[0].mxu0
        %v597 = vpop.f32.mrb[0].mxu0
        %v598 = vadd.f32 %v550, %v597
        %v599 = vpop.f32.mrb[0].mxu0
        %600 = vdwg.mxu0
        %v601 = vmul.f32 %v547, %v595
        %v602 = vmul.f32 %v548, %v598
        %v604 = vlaneseq
        %v605 = vshrl.u32 %v604, 7
        %v606 = vsub.s32 0, %v605
        %v607 = vrot.slane %v415, %v606
        %v609 = vadd.f32 %v601, %v607
        %v610 = vadd.f32 %v602, %v607
        %vm611 = vcmp.gt.f32.partialorder %v609, 0.0
        %vm612 = vcmp.gt.f32.partialorder %v610, 0.0
        %v613 = vmul.f32 %v609, 1.442695
        %v614 = vpow.pop %v613
        %v615 = vmul.f32 %v610, 1.442695
        %v616 = vpow.pop %v615
        %v617 = vsub.f32 %v614, 1.0
        %v618 = vsub.f32 %v616, 1.0
        %v619 = vmul.f32 %v617, 1.6732632
        %v620 = vmul.f32 %v618, 1.6732632
        %v621 = vsel %vm611, %v609, %v619
        %v622 = vsel %vm612, %v610, %v620
        %v623 = vmul.f32 %v621, 1.050701
        %v624 = vmul.f32 %v622, 1.050701
        %v625 = vmul.f32 %v623, %v430
        %v626 = vmul.f32 %v624, %v431
        %v628 = vlaneseq
        %v629 = vshrl.u32 %v628, 7
        %v630 = vsub.s32 0, %v629
        %v631 = vrot.slane %v420, %v630
        %vm633 = vcmask 261120
        %v635 = vsel %vm633, %v625, 0
        %v638 = vsel %vm633, %v626, 0
        %640 = vmatprep.subr.mxu0 0.0
        %641 = vmatpush1.msra.mxu0 %v416
        %642 = vmatprep.subr.mxu0 0.0
        %643 = vmatpush1.msra.mxu0 %v417
        %644 = vmatprep.subr.mxu0 0.0
        %645 = vmatpush1.msra.mxu0 %v418
        %646 = vmatprep.subr.mxu0 0.0
        %647 = vmatpush1.msra.mxu0 %v419
        %648 = vmatprep.subr.mxu0 0.0
        %649 = vmatpush1.msra.mxu0 0.0
        %650 = vmatprep.subr.mxu0 0.0
        %651 = vmatpush1.msra.mxu0 0.0
        %652 = vmatprep.subr.mxu0 0.0
        %653 = vmatpush1.msra.mxu0 0.0
        %654 = vmatprep.subr.mxu0 0.0
        %655 = vmatpush1.msra.mxu0 0.0
        %656 = vmatprep.subr.mxu0 0.0
        %657 = vmatpush1.msra.mxu0 0.0
        %658 = vmatprep.subr.mxu0 0.0
        %659 = vmatpush1.msra.mxu0 0.0
        %660 = vmatprep.subr.mxu0 0.0
        %661 = vmatpush1.msra.mxu0 0.0
        %662 = vmatprep.subr.mxu0 0.0
        %663 = vmatpush1.msra.mxu0 0.0
        %664 = vmatprep.subr.mxu0 0.0
        %665 = vmatpush1.msra.mxu0 0.0
        %666 = vmatprep.subr.mxu0 0.0
        %667 = vmatpush1.msra.mxu0 0.0
        %668 = vmatprep.subr.mxu0 0.0
        %669 = vmatpush1.msra.mxu0 0.0
        %670 = vmatprep.subr.mxu0 0.0
        %671 = vmatpush1.msra.mxu0 0.0
        %672 = vmatprep.subr.mxu0 0.0
        %673 = vmatpush1.msra.mxu0 0.0
        %674 = vmatprep.subr.mxu0 0.0
        %675 = vmatpush1.msra.mxu0 0.0
        %676 = vmatprep.subr.mxu0 0.0
        %677 = vmatpush1.msra.mxu0 0.0
        %678 = vmatprep.subr.mxu0 0.0
        %679 = vmatpush1.msra.mxu0 0.0
        %680 = vmatprep.subr.mxu0 0.0
        %681 = vmatpush1.msra.mxu0 0.0
        %682 = vmatprep.subr.mxu0 0.0
        %683 = vmatpush1.msra.mxu0 0.0
        %684 = vmatprep.subr.mxu0 0.0
        %685 = vmatpush1.msra.mxu0 0.0
        %686 = vmatprep.subr.mxu0 0.0
        %687 = vmatpush1.msra.mxu0 0.0
        %688 = vmatprep.subr.mxu0 0.0
        %689 = vmatpush1.msra.mxu0 0.0
        %690 = vmatprep.subr.mxu0 0.0
        %691 = vmatpush1.msra.mxu0 0.0
        %692 = vmatprep.subr.mxu0 0.0
        %693 = vmatpush1.msra.mxu0 0.0
        %694 = vmatprep.subr.mxu0 0.0
        %695 = vmatpush1.msra.mxu0 0.0
        %696 = vmatprep.subr.mxu0 0.0
        %697 = vmatpush1.msra.mxu0 0.0
        %698 = vmatprep.subr.mxu0 0.0
        %699 = vmatpush1.msra.mxu0 0.0
        %700 = vmatprep.subr.mxu0 0.0
        %701 = vmatpush1.msra.mxu0 0.0
        %702 = vmatprep.subr.mxu0 0.0
        %703 = vmatpush1.msra.mxu0 0.0
        %704 = vmatprep.mubr.f32.mxu0 0.0
        %705 = vmatmul.mubr.f32.gmra.mrb[0].mxu0 %v635
        %v706 = vpop.f32.mrb[0].mxu0
        %v707 = vadd.f32 %v631, %v706
        %v708 = vpop.f32.mrb[0].mxu0
        %709 = vmatprep.mubr.f32.mxu0 0.0
        %710 = vmatmul.mubr.f32.gmra.mrb[0].mxu0 %v638
        %v711 = vpop.f32.mrb[0].mxu0
        %v712 = vadd.f32 %v631, %v711
        %v713 = vpop.f32.mrb[0].mxu0
        %714 = vdwg.mxu0
        %vm715 = vcmask 64512
        %v716 = vsel %vm715, %v707, -inf
        %717 = vmax.xlane.f32.xlu0 %v716
        %v718 = vpop.xlane.xlu0 %717
        %v719 = vsel %vm715, %v712, -inf
        %720 = vmax.xlane.f32.xlu0 %v719
        %v721 = vpop.xlane.xlu0 %720
        %v722 = vsub.f32 %v707, %v718
        %v723 = vsub.f32 %v712, %v721
        %v724 = vmul.f32 %v722, 1.442695
        %v725 = vpow.pop %v724
        %v726 = vmul.f32 %v723, 1.442695
        %v727 = vpow.pop %v726
        %v728 = vsel %vm715, %v725, 0.0
        %729 = vadd.xlane.f32.xlu0 %v728
        %v730 = vpop.xlane.xlu0 %729
        %v731 = vsel %vm715, %v727, 0.0
        %732 = vadd.xlane.f32.xlu0 %v731
        %v733 = vpop.xlane.xlu0 %732
        %v734 = vrcp.pop %v730
        %v735 = vrcp.pop %v733
        %v736 = vmul.f32 %v725, %v734
        %v737 = vmul.f32 %v727, %v735
        %v738 = vmul.f32 %v736, %v430
        %v739 = vmul.f32 %v737, %v431
        %740 = vst.msk [vmem:[%s406] sm:$0xff] %vm715, %v738
        %741 = vst.msk [vmem:[%s406 + $0x8] sm:$0xff] %vm715, %v739
        %742 = vxpose.xlu0.b32.start [1/16] %v738, 128
        %743 = vxpose.xlu0.b32.cont [2/16] %v739, 128
        %744 = vxpose.xlu0.b32.cont [3/16] 0.0, 128
        %745 = vxpose.xlu0.b32.cont [4/16] 0.0, 128
        %746 = vxpose.xlu0.b32.cont [5/16] 0.0, 128
        %747 = vxpose.xlu0.b32.cont [6/16] 0.0, 128
        %748 = vxpose.xlu0.b32.cont [7/16] 0.0, 128
        %749 = vxpose.xlu0.b32.cont [8/16] 0.0, 128
        %750 = vxpose.xlu0.b32.cont [9/16] 0.0, 128
        %751 = vxpose.xlu0.b32.cont [10/16] 0.0, 128
        %752 = vxpose.xlu0.b32.cont [11/16] 0.0, 128
        %753 = vxpose.xlu0.b32.cont [12/16] 0.0, 128
        %754 = vxpose.xlu0.b32.cont [13/16] 0.0, 128
        %755 = vxpose.xlu0.b32.cont [14/16] 0.0, 128
        %756 = vxpose.xlu0.b32.cont [15/16] 0.0, 128
        %757 = vxpose.xlu0.b32.end [16/16] 0.0, 128
        %v758 = vpop.trf.xlu0
        %v759 = vpop.trf.xlu0
        %v760 = vpop.trf.xlu0
        %v761 = vpop.trf.xlu0
        %v762 = vpop.trf.xlu0
        %v763 = vpop.trf.xlu0
        %v764 = vpop.trf.xlu0
        %v765 = vpop.trf.xlu0
        %v766 = vpop.trf.xlu0
        %v767 = vpop.trf.xlu0
        %v768 = vpop.trf.xlu0
        %v769 = vpop.trf.xlu0
        %v770 = vpop.trf.xlu0
        %v771 = vpop.trf.xlu0
        %v772 = vpop.trf.xlu0
        %v773 = vpop.trf.xlu0
        %v775 = vsel %vm538, %v758, 0
        %777 = vmatprep.subr.mxu0 0.0
        %778 = vmatpush1.msra.mxu0 %v625
        %779 = vmatprep.subr.mxu0 0.0
        %780 = vmatpush1.msra.mxu0 %v626
        %781 = vmatprep.subr.mxu0 0.0
        %782 = vmatpush1.msra.mxu0 0.0
        %783 = vmatprep.subr.mxu0 0.0
        %784 = vmatpush1.msra.mxu0 0.0
        %785 = vmatprep.subr.mxu0 0.0
        %786 = vmatpush1.msra.mxu0 0.0
        %787 = vmatprep.subr.mxu0 0.0
        %788 = vmatpush1.msra.mxu0 0.0
        %789 = vmatprep.subr.mxu0 0.0
        %790 = vmatpush1.msra.mxu0 0.0
        %791 = vmatprep.subr.mxu0 0.0
        %792 = vmatpush1.msra.mxu0 0.0
        %793 = vmatprep.subr.mxu0 0.0
        %794 = vmatpush1.msra.mxu0 0.0
        %795 = vmatprep.subr.mxu0 0.0
        %796 = vmatpush1.msra.mxu0 0.0
        %797 = vmatprep.subr.mxu0 0.0
        %798 = vmatpush1.msra.mxu0 0.0
        %799 = vmatprep.subr.mxu0 0.0
        %800 = vmatpush1.msra.mxu0 0.0
        %801 = vmatprep.subr.mxu0 0.0
        %802 = vmatpush1.msra.mxu0 0.0
        %803 = vmatprep.subr.mxu0 0.0
        %804 = vmatpush1.msra.mxu0 0.0
        %805 = vmatprep.subr.mxu0 0.0
        %806 = vmatpush1.msra.mxu0 0.0
        %807 = vmatprep.subr.mxu0 0.0
        %808 = vmatpush1.msra.mxu0 0.0
        %809 = vmatprep.subr.mxu0 0.0
        %810 = vmatpush1.msra.mxu0 0.0
        %811 = vmatprep.subr.mxu0 0.0
        %812 = vmatpush1.msra.mxu0 0.0
        %813 = vmatprep.subr.mxu0 0.0
        %814 = vmatpush1.msra.mxu0 0.0
        %815 = vmatprep.subr.mxu0 0.0
        %816 = vmatpush1.msra.mxu0 0.0
        %817 = vmatprep.subr.mxu0 0.0
        %818 = vmatpush1.msra.mxu0 0.0
        %819 = vmatprep.subr.mxu0 0.0
        %820 = vmatpush1.msra.mxu0 0.0
        %821 = vmatprep.subr.mxu0 0.0
        %822 = vmatpush1.msra.mxu0 0.0
        %823 = vmatprep.subr.mxu0 0.0
        %824 = vmatpush1.msra.mxu0 0.0
        %825 = vmatprep.subr.mxu0 0.0
        %826 = vmatpush1.msra.mxu0 0.0
        %827 = vmatprep.subr.mxu0 0.0
        %828 = vmatpush1.msra.mxu0 0.0
        %829 = vmatprep.subr.mxu0 0.0
        %830 = vmatpush1.msra.mxu0 0.0
        %831 = vmatprep.subr.mxu0 0.0
        %832 = vmatpush1.msra.mxu0 0.0
        %833 = vmatprep.subr.mxu0 0.0
        %834 = vmatpush1.msra.mxu0 0.0
        %835 = vmatprep.subr.mxu0 0.0
        %836 = vmatpush1.msra.mxu0 0.0
        %837 = vmatprep.subr.mxu0 0.0
        %838 = vmatpush1.msra.mxu0 0.0
        %839 = vmatprep.subr.mxu0 0.0
        %840 = vmatpush1.msra.mxu0 0.0
        %841 = vmatprep.mubr.f32.mxu0 0.0
        %842 = vmatmul.mubr.f32.gmra.mrb[0].mxu0 %v775
        %v843 = vpop.f32.mrb[0].mxu0
        %v844 = vadd.f32 0.0, %v843
        %v845 = vpop.f32.mrb[0].mxu0
        %846 = vdwg.mxu0
        %vm847 = vcmp.gt.f32.partialorder %v844, 0.0
        %v848 = vmul.f32 %v844, 1.442695
        %v849 = vpow.pop %v848
        %v850 = vsub.f32 %v849, 1.0
        %v851 = vmul.f32 %v850, 1.6732632
        %v852 = vsel %vm847, %v844, %v851
        %v853 = vmul.f32 %v852, 1.050701
        %v854 = vmul.f32 %v541, %v430
        %v855 = vmul.f32 %v544, %v431
        %v856 = vadd.f32 %v854, %v855
        %v857 = vrot.slane %v856, 4
        %v858 = vadd.f32 %v856, %v857
        %v859 = vrot.slane %v858, 2
        %v860 = vadd.f32 %v858, %v859
        %v861 = vrot.slane %v860, 1
        %v862 = vadd.f32 %v860, %v861
        %vm863 = vcmp.gt.f32.partialorder %v862, 0.0
        %v864 = vmax.f32 %v862, 1e-12
        %v865 = vrcp.pop %v864
        %v866 = vmul.f32 1.0, %v865
        %v867 = vsel %vm863, %v866, 0.0
        %v868 = vmul.f32 %v738, %v854
        %v869 = vmul.f32 %v739, %v855
        %v870 = vsel %vm715, %v868, 0.0
        %v871 = vsel %vm715, %v869, 0.0
        %v872 = vadd.f32 %v870, %v871
        %v873 = vrot.slane %v872, 4
        %v874 = vadd.f32 %v872, %v873
        %v875 = vrot.slane %v874, 2
        %v876 = vadd.f32 %v874, %v875
        %v877 = vrot.slane %v876, 1
        %v878 = vadd.f32 %v876, %v877
        %v879 = vpack.c.bf16 %v739, %v738
        %880 = vmatprep.subr.bf16.mxu0 0
        %881 = vmatpush1.bf16.msra.mxu0 %v879
        %882 = vmatprep.subr.bf16.mxu0 0
        %883 = vmatpush1.bf16.msra.mxu0 0
        %884 = vmatprep.subr.bf16.mxu0 0
        %885 = vmatpush1.bf16.msra.mxu0 0
        %886 = vmatprep.subr.bf16.mxu0 0
        %887 = vmatpush1.bf16.msra.mxu0 0
        %888 = vmatprep.subr.bf16.mxu0 0
        %889 = vmatpush1.bf16.msra.mxu0 0
        %890 = vmatprep.subr.bf16.mxu0 0
        %891 = vmatpush1.bf16.msra.mxu0 0
        %892 = vmatprep.subr.bf16.mxu0 0
        %893 = vmatpush1.bf16.msra.mxu0 0
        %894 = vmatprep.subr.bf16.mxu0 0
        %895 = vmatpush1.bf16.msra.mxu0 0
        %896 = vmatprep.subr.bf16.mxu0 0
        %897 = vmatpush1.bf16.msra.mxu0 0
        %898 = vmatprep.subr.bf16.mxu0 0
        %899 = vmatpush1.bf16.msra.mxu0 0
        %900 = vmatprep.subr.bf16.mxu0 0
        %901 = vmatpush1.bf16.msra.mxu0 0
        %902 = vmatprep.subr.bf16.mxu0 0
        %903 = vmatpush1.bf16.msra.mxu0 0
        %904 = vmatprep.subr.bf16.mxu0 0
        %905 = vmatpush1.bf16.msra.mxu0 0
        %906 = vmatprep.subr.bf16.mxu0 0
        %907 = vmatpush1.bf16.msra.mxu0 0
        %908 = vmatprep.subr.bf16.mxu0 0
        %909 = vmatpush1.bf16.msra.mxu0 0
        %910 = vmatprep.subr.bf16.mxu0 0
        %911 = vmatpush1.bf16.msra.mxu0 0
        %912 = vmatprep.mubr.bf16.mxu0 0
        %913 = vmatmul.mubr.bf16.gmra.mrb[0].mxu0 %v558
        %v914 = vpop.f32.mrb[0].mxu0
        %v915 = vadd.f32 0.0, %v914
        %v916 = vpop.f32.mrb[0].mxu0
        %v917 = vpop.f32.mrb[0].mxu0
        %v918 = vadd.f32 0.0, %v917
        %v919 = vpop.f32.mrb[0].mxu0
        %920 = vdwg.mxu0
        %v921 = vmul.f32 %v738, %v915
        %v922 = vmul.f32 %v739, %v918
        %v923 = vsel %vm715, %v921, 0.0
        %924 = vadd.xlane.f32.xlu0 %v923
        %v925 = vpop.xlane.xlu0 %924
        %v926 = vsel %vm715, %v922, 0.0
        %927 = vadd.xlane.f32.xlu0 %v926
        %v928 = vpop.xlane.xlu0 %927
        %v929 = vadd.f32 %v925, %v928
        %v930 = vrot.slane %v929, 4
        %v931 = vadd.f32 %v929, %v930
        %v932 = vrot.slane %v931, 2
        %v933 = vadd.f32 %v931, %v932
        %v934 = vrot.slane %v933, 1
        %v935 = vadd.f32 %v933, %v934
        %v936 = vmul.f32 %v878, %v878
        %v937 = vsel %vm715, %v936, 0.0
        %938 = vadd.xlane.f32.xlu0 %v937
        %v939 = vpop.xlane.xlu0 %938
        %v940 = vmul.f32 %v939, %v867
        %v941 = vsub.f32 %v935, %v940
        %v942 = vsub.f32 0.0, %v941
        %v943 = vmul.f32 %v942, %v867
        %944 = vmatprep.subr.mxu0 0.0
        %945 = vmatpush1.msra.mxu0 %v738
        %946 = vmatprep.subr.mxu0 0.0
        %947 = vmatpush1.msra.mxu0 %v739
        %948 = vmatprep.subr.mxu0 0.0
        %949 = vmatpush1.msra.mxu0 0.0
        %950 = vmatprep.subr.mxu0 0.0
        %951 = vmatpush1.msra.mxu0 0.0
        %952 = vmatprep.subr.mxu0 0.0
        %953 = vmatpush1.msra.mxu0 0.0
        %954 = vmatprep.subr.mxu0 0.0
        %955 = vmatpush1.msra.mxu0 0.0
        %956 = vmatprep.subr.mxu0 0.0
        %957 = vmatpush1.msra.mxu0 0.0
        %958 = vmatprep.subr.mxu0 0.0
        %959 = vmatpush1.msra.mxu0 0.0
        %960 = vmatprep.subr.mxu0 0.0
        %961 = vmatpush1.msra.mxu0 0.0
        %962 = vmatprep.subr.mxu0 0.0
        %963 = vmatpush1.msra.mxu0 0.0
        %964 = vmatprep.subr.mxu0 0.0
        %965 = vmatpush1.msra.mxu0 0.0
        %966 = vmatprep.subr.mxu0 0.0
        %967 = vmatpush1.msra.mxu0 0.0
        %968 = vmatprep.subr.mxu0 0.0
        %969 = vmatpush1.msra.mxu0 0.0
        %970 = vmatprep.subr.mxu0 0.0
        %971 = vmatpush1.msra.mxu0 0.0
        %972 = vmatprep.subr.mxu0 0.0
        %973 = vmatpush1.msra.mxu0 0.0
        %974 = vmatprep.subr.mxu0 0.0
        %975 = vmatpush1.msra.mxu0 0.0
        %976 = vmatprep.subr.mxu0 0.0
        %977 = vmatpush1.msra.mxu0 0.0
        %978 = vmatprep.subr.mxu0 0.0
        %979 = vmatpush1.msra.mxu0 0.0
        %980 = vmatprep.subr.mxu0 0.0
        %981 = vmatpush1.msra.mxu0 0.0
        %982 = vmatprep.subr.mxu0 0.0
        %983 = vmatpush1.msra.mxu0 0.0
        %984 = vmatprep.subr.mxu0 0.0
        %985 = vmatpush1.msra.mxu0 0.0
        %986 = vmatprep.subr.mxu0 0.0
        %987 = vmatpush1.msra.mxu0 0.0
        %988 = vmatprep.subr.mxu0 0.0
        %989 = vmatpush1.msra.mxu0 0.0
        %990 = vmatprep.subr.mxu0 0.0
        %991 = vmatpush1.msra.mxu0 0.0
        %992 = vmatprep.subr.mxu0 0.0
        %993 = vmatpush1.msra.mxu0 0.0
        %994 = vmatprep.subr.mxu0 0.0
        %995 = vmatpush1.msra.mxu0 0.0
        %996 = vmatprep.subr.mxu0 0.0
        %997 = vmatpush1.msra.mxu0 0.0
        %998 = vmatprep.subr.mxu0 0.0
        %999 = vmatpush1.msra.mxu0 0.0
        %1000 = vmatprep.subr.mxu0 0.0
        %1001 = vmatpush1.msra.mxu0 0.0
        %1002 = vmatprep.subr.mxu0 0.0
        %1003 = vmatpush1.msra.mxu0 0.0
        %1004 = vmatprep.subr.mxu0 0.0
        %1005 = vmatpush1.msra.mxu0 0.0
        %1006 = vmatprep.subr.mxu0 0.0
        %1007 = vmatpush1.msra.mxu0 0.0
        %1008 = vmatprep.mubr.f32.mxu0 0.0
        %1009 = vmatmul.mubr.f32.gmra.mrb[0].mxu0 %v775
        %v1010 = vpop.f32.mrb[0].mxu0
        %v1011 = vadd.f32 0.0, %v1010
        %v1012 = vpop.f32.mrb[0].mxu0
        %1013 = vdwg.mxu0
        %v1014 = vmul.f32 %v1011, %v1011
        %v1015 = vsel %vm715, %v1014, 0.0
        %1016 = vadd.xlane.f32.xlu0 %v1015
        %v1017 = vpop.xlane.xlu0 %1016
        %v1018 = vrot.slane %v1017, 4
        %v1019 = vadd.f32 %v1017, %v1018
        %v1020 = vrot.slane %v1019, 2
        %v1021 = vadd.f32 %v1019, %v1020
        %v1022 = vrot.slane %v1021, 1
        %v1023 = vadd.f32 %v1021, %v1022
        %v1024 = vrsqrt.pop %v1023
        %v1025 = vmul.f32 %v1023, %v1024
        %vm1026 = vcmp.eq.f32.partialorder %v1023, inf
        %v1027 = vsel %vm1026, %v1023, %v1025
        %vm1028 = vcmp.eq.f32.partialorder %v1023, 0.0
        %v1029 = vand.u32 %v1023, 2147483648
        %v1030 = vsel %vm1028, %v1029, %v1027
        %vm1031 = vcmp.gt.f32.partialorder %v1030, 0.0
        %v1032 = vmax.f32 %v1030, 1e-12
        %v1033 = vrcp.pop %v1032
        %v1034 = vmul.f32 1.0, %v1033
        %v1035 = vsel %vm1031, %v1034, 0.0
        %v1036 = vlaneseq
        %v1037 = vand.u32 %v1036, 127
        %vm1038 = vcmp.eq.s32.totalorder %v422, %v1037
        %v1039 = vsel %vm1038, 1.0, 0.0
        %v1040 = vmul.f32 %v1011, %v1035
        %v1041 = vmul.f32 %v1039, 0.35355338
        %v1042 = vsub.f32 %v1040, %v1041
        %v1043 = vmul.f32 %v1042, %v1042
        %v1044 = vsel %vm715, %v1043, 0.0
        %1045 = vadd.xlane.f32.xlu0 %v1044
        %v1046 = vpop.xlane.xlu0 %1045
        %v1047 = vrot.slane %v1046, 4
        %v1048 = vadd.f32 %v1046, %v1047
        %v1049 = vrot.slane %v1048, 2
        %v1050 = vadd.f32 %v1048, %v1049
        %v1051 = vrot.slane %v1050, 1
        %v1052 = vadd.f32 %v1050, %v1051
        %v1053 = vrsqrt.pop %v1052
        %v1054 = vmul.f32 %v1052, %v1053
        %vm1055 = vcmp.eq.f32.partialorder %v1052, inf
        %v1056 = vsel %vm1055, %v1052, %v1054
        %vm1057 = vcmp.eq.f32.partialorder %v1052, 0.0
        %v1058 = vand.u32 %v1052, 2147483648
        %v1059 = vsel %vm1057, %v1058, %v1056
        %v1060 = vsel %vm715, %v738, 0.0
        %v1061 = vsel %vm715, %v739, 0.0
        %v1062 = vadd.f32 %v1060, %v1061
        %v1063 = vrot.slane %v1062, 4
        %v1064 = vadd.f32 %v1062, %v1063
        %v1065 = vrot.slane %v1064, 2
        %v1066 = vadd.f32 %v1064, %v1065
        %v1067 = vrot.slane %v1066, 1
        %v1068 = vadd.f32 %v1066, %v1067
        %v1069 = vmul.f32 %v1068, %v1068
        %v1070 = vsel %vm715, %v1069, 0.0
        %1071 = vadd.xlane.f32.xlu0 %v1070
        %v1072 = vpop.xlane.xlu0 %1071
        %v1073 = vrsqrt.pop %v1072
        %v1074 = vmul.f32 %v1072, %v1073
        %vm1075 = vcmp.eq.f32.partialorder %v1072, inf
        %v1076 = vsel %vm1075, %v1072, %v1074
        %vm1077 = vcmp.eq.f32.partialorder %v1072, 0.0
        %v1078 = vand.u32 %v1072, 2147483648
        %v1079 = vsel %vm1077, %v1078, %v1076
        %vm1080 = vcmp.gt.f32.partialorder %v433, 0.0
        %v1081 = vmax.f32 %v433, 1e-12
        %v1082 = vrcp.pop %v1081
        %v1083 = vmul.f32 1.0, %v1082
        %v1084 = vsel %vm1080, %v1083, 0.0
        %v1085 = vmul.f32 %v1079, %v1084
        %v1086 = vmul.f32 %v1085, 2.828427
        %v1087 = vsub.f32 %v1086, 1.0
        %v1088 = vsel %vm1080, 1.0, 0.0
        %v1089 = vmul.f32 %v943, %v1088
        %v1090 = vmul.f32 %v1059, %v1088
        %v1091 = vmul.f32 %v1087, %v1088
        %v1092 = vsel %vm633, %v853, -inf
        %1093 = vmax.xlane.f32.xlu0 %v1092
        %v1094 = vpop.xlane.xlu0 %1093
        %v1095 = vsub.f32 %v853, %v1094
        %v1096 = vmul.f32 %v1095, 1.442695
        %v1097 = vpow.pop %v1096
        %v1098 = vsel %vm633, %v1097, 0.0
        %1099 = vadd.xlane.f32.xlu0 %v1098
        %v1100 = vpop.xlane.xlu0 %1099
        %v1101 = vlog2.pop %v1100
        %v1102 = vmul.f32 %v1101, 0.6931472
        %v1103 = vsub.f32 %v1095, %v1102
        %1104 = vst.msk [vmem:[%s378] sm:$0xff] %vm633, %v1103
        %vm1105 = vcmp.eq.s32.totalorder %v1037, 0
        %vm1106 = vcmp.eq.s32.totalorder %v1037, 1
        %vm1107 = vcmp.eq.s32.totalorder %v1037, 2
        %v1108 = vsel %vm1107, %v1091, 0.0
        %v1109 = vsel %vm1106, %v1090, %v1108
        %v1110 = vsel %vm1105, %v1089, %v1109
        %1111 = vst [vmem:[%s391] sm:$0x1] %v1110
        %s1112 = sand.u32 %s221, 1
        %s1113 = scalar_lea.sflag [#allocation5], %s1112
        %s1114 = sand.u32 %s221, 1
        %s1115 = smul.addr %s1114, 8
        %s1116 = scalar_lea.vmem [#allocation4], %s1115
        %p1117 = scmp.lt.s32.totalorder %s35, 3
        %s1118 = scalar_select %p1117, %s35, 3
        %s1119 = smul.addr %s1118, 2
        %s1120 = smul.addr %s1119, 8
        %s1121 = scalar_lea.vmem %s10, %s1120
        %s1122 = sand.u32 %s273, 1
        %s1123 = scalar_lea.sflag [#allocation7], %s1122
        %s1124 = sand.u32 %s273, 1
        %s1125 = scalar_lea.vmem [#allocation6], %s1124
        // Predicated region
        $region53: #{tpu_custom_call.1} parent=51 // pred_check
          %p1126 = pneg %p231
        $region54: #{tpu_custom_call.1} parent=51 // pred_check_branch
          %1128 = sbr.rel (%p1126) target = $region56
        $region55: #{tpu_custom_call.1} parent=51 // pred_region
          %s1130 = ssub.s32 128, 128
          %1131 = vsyncadd %s1113, %s1130
          %s1132 = smul.addr %s35, 128
          %s1133 = scalar_lea.hbm %s9, %s1132
          %s1135 = sshll.u32 %s1116, 4
          %s1136 = int_to_ptr.vmem [resolvable:$true] %s1135
          %1138 = dma.vmem_to_hbm [thread:$0]  %s1136, 128, %s1133, %s1113
        $region56: #{tpu_custom_call.1} parent=51 // pred_fallthru
          _
        // Predicated region
        $region57: #{tpu_custom_call.1} parent=51 // pred_check
          %p1139 = pneg %p257
        $region58: #{tpu_custom_call.1} parent=51 // pred_check_branch
          %1141 = sbr.rel (%p1139) target = $region60
        $region59: #{tpu_custom_call.1} parent=51 // pred_region
          _
        $region60: #{tpu_custom_call.1} parent=51 // pred_fallthru
          _
        // Predicated region
        $region61: #{tpu_custom_call.1} parent=51 // pred_check
          %p1142 = pneg %p283
        $region62: #{tpu_custom_call.1} parent=51 // pred_check_branch
          %1144 = sbr.rel (%p1142) target = $region64
        $region63: #{tpu_custom_call.1} parent=51 // pred_region
          %s1146 = ssub.s32 16, 16
          %1147 = vsyncadd %s1123, %s1146
          %s1148 = smul.addr %s35, 16
          %s1149 = scalar_lea.hbm %s11, %s1148
          %s1151 = sshll.u32 %s1125, 4
          %s1152 = int_to_ptr.vmem [resolvable:$true] %s1151
          %1154 = dma.vmem_to_hbm [thread:$0]  %s1152, 16, %s1149, %s1123
        $region64: #{tpu_custom_call.1} parent=51 // pred_fallthru
          _
      $region52: #{tpu_custom_call.1} parent=5 // pred_fallthru
        _
      %p1155 = scmp.le.s32.totalorder 2, %s30
      // Predicated region
      $region65: #{tpu_custom_call.1} parent=5 // pred_check
        %p1156 = pneg %p1155
      $region66: #{tpu_custom_call.1} parent=5 // pred_check_branch
        %1158 = sbr.rel (%p1156) target = $region68
      $region67: #{tpu_custom_call.1} parent=5 // pred_region
        %s1159 = ssub.s32 %s30, 2
        // Predicated region
        $region69: #{tpu_custom_call.1} parent=67 // pred_check
          %p1160 = pneg %p237
        $region70: #{tpu_custom_call.1} parent=67 // pred_check_branch
          %1162 = sbr.rel (%p1160) target = $region72
        $region71: #{tpu_custom_call.1} parent=67 // pred_region
          %s1163 = sand.u32 %s222, 1
          %s1164 = scalar_lea.sflag [#allocation5], %s1163
          %s1165 = sand.u32 %s222, 1
          %s1166 = smul.addr %s1165, 8
          %s1167 = scalar_lea.vmem [#allocation4], %s1166
          %1168 = dma.done %s1164, 128
        $region72: #{tpu_custom_call.1} parent=67 // pred_fallthru
          _
        // Predicated region
        $region73: #{tpu_custom_call.1} parent=67 // pred_check
          %p1169 = pneg %p263
        $region74: #{tpu_custom_call.1} parent=67 // pred_check_branch
          %1171 = sbr.rel (%p1169) target = $region76
        $region75: #{tpu_custom_call.1} parent=67 // pred_region
          %p1172 = scmp.lt.s32.totalorder %s36, 3
          %s1173 = scalar_select %p1172, %s36, 3
          %s1174 = smul.addr %s1173, 2
          %s1175 = smul.addr %s1174, 8
          %s1176 = scalar_lea.vmem %s10, %s1175
        $region76: #{tpu_custom_call.1} parent=67 // pred_fallthru
          _
        // Predicated region
        $region77: #{tpu_custom_call.1} parent=67 // pred_check
          %p1177 = pneg %p289
        $region78: #{tpu_custom_call.1} parent=67 // pred_check_branch
          %1179 = sbr.rel (%p1177) target = $region80
        $region79: #{tpu_custom_call.1} parent=67 // pred_region
          %s1180 = sand.u32 %s274, 1
          %s1181 = scalar_lea.sflag [#allocation7], %s1180
          %s1182 = sand.u32 %s274, 1
          %s1183 = scalar_lea.vmem [#allocation6], %s1182
          %1184 = dma.done %s1181, 16
        $region80: #{tpu_custom_call.1} parent=67 // pred_fallthru
          _
      $region68: #{tpu_custom_call.1} parent=5 // pred_fallthru
        _
    $region6: #{tpu_custom_call.1} parent=1 // loop_footer
      %s34 = sadd.s32 1, %s30
    $region7: #{tpu_custom_call.1} parent=1 // loop_footer_branch
      %29 = sbr.rel target = $region3
    $region8: #{tpu_custom_call.1} parent=1 // loop_exit
      _
    %1185 = vsyncpa [#allocation5], 1
    %s1186 = scalar_lea.sflag [#allocation5], 1
    %1187 = vsyncpa %s1186, 1
    %1188 = vsyncpa [#allocation7], 1
    %s1189 = scalar_lea.sflag [#allocation7], 1
    %1190 = vsyncpa %s1189, 1

</llo_original>
